<compile_context>
chip_gen: v5e
topology: v5e:2x2
jax: 0.10.0
libtpu: 0.0.40
codegen_flags: <defaults>
</compile_context>

<pallas_src>
import functools
import numpy as np
import jax
import jax.numpy as jnp
from jax.experimental import pallas as pl
from jax.experimental.pallas import tpu as pltpu


# ----------------------------------------------------------------------------
# Fused kernel: 1x1 conv (channel matmul + bias)  ->  bilinear x2  ->  hardswish
# ----------------------------------------------------------------------------
def fused_kernel(x_ref, w_ref, b_ref, a2_ref, o_ref):
    # x_ref : (1, M, Cin)    cropped input, channels-last, flattened spatial
    # w_ref : (Cin, Cout)    ConvTranspose2d 1x1 weight in native orientation
    # b_ref : (1, Cout)
    # a2_ref: (Mo, M)        kron(Ah, Aw) bilinear x2 interpolation matrix
    # o_ref : (1, Mo, Cout)
    y = jnp.dot(x_ref[0], w_ref[...], preferred_element_type=jnp.float32)
    y = y + b_ref[...]                                         # (M, Cout)
    u = jnp.dot(a2_ref[...], y, preferred_element_type=jnp.float32)  # (Mo, Cout)
    # hardswish-style tail: u * clamp(u+3, 0, 6) * (1/6)
    o_ref[0] = (u * jnp.clip(u + 3.0, 0.0, 6.0) * (1.0 / 6.0)).astype(o_ref.dtype)


# ----------------------------------------------------------------------------
# Static interpolation matrices (PyTorch bilinear, align_corners=False)
# ----------------------------------------------------------------------------
def _axis_matrix(out_size, in_size):
    A = np.zeros((out_size, in_size), np.float32)
    scale = in_size / out_size
    for o in range(out_size):
        src = (o + 0.5) * scale - 0.5
        src = max(src, 0.0)
        i0 = min(int(np.floor(src)), in_size - 1)
        i1 = min(i0 + 1, in_size - 1)
        frac = src - i0
        A[o, i0] += 1.0 - frac
        A[o, i1] += frac
    return A


@functools.lru_cache(maxsize=None)
def _interp_matrix(hc, wc):
    ah = _axis_matrix(2 * hc, hc)          # (Ho, Hc)
    aw = _axis_matrix(2 * wc, wc)          # (Wo, Wc)
    return np.kron(ah, aw).astype(np.float32)   # (Ho*Wo, Hc*Wc)


# ----------------------------------------------------------------------------
# Wrapper (external interface is NCHW, like the PyTorch module)
# ----------------------------------------------------------------------------
def model_forward(x, w, b):
    """x: (B, 384, H, W) NCHW.  w: (384, 512, 1, 1) ConvTranspose2d weight.  b: (512,)."""
    B, Cin, H, W = x.shape
    Cout = w.shape[1]
    Hc, Wc = H - 2, W - 2                  # k=1, s=1, p=1 transposed conv -> crop border
    Ho, Wo = 2 * Hc, 2 * Wc
    M, Mo = Hc * Wc, Ho * Wo

    # Layout plumbing only (one XLA copy): crop + NCHW->channels-last + flatten spatial.
    xc = jnp.transpose(x[:, :, 1:H - 1, 1:W - 1], (0, 2, 3, 1)).reshape(B, M, Cin)
    w_mat = w[:, :, 0, 0]                  # (Cin, Cout) native orientation (no transpose)
    b2 = b.reshape(1, Cout)
    a2 = jnp.asarray(_interp_matrix(Hc, Wc))     # (Mo, M)

    out_flat = pl.pallas_call(
        fused_kernel,
        out_shape=jax.ShapeDtypeStruct((B, Mo, Cout), jnp.float32),
        grid=(B,),
        in_specs=[
            pl.BlockSpec((1, M, Cin), lambda bb: (bb, 0, 0)),
            pl.BlockSpec((Cin, Cout), lambda bb: (0, 0)),
            pl.BlockSpec((1, Cout), lambda bb: (0, 0)),
            pl.BlockSpec((Mo, M), lambda bb: (0, 0)),
        ],
        out_specs=pl.BlockSpec((1, Mo, Cout), lambda bb: (bb, 0, 0)),
        compiler_params=pltpu.CompilerParams(
            dimension_semantics=("parallel",)),
    )(xc, w_mat, b2, a2)

    # channels-last flat -> NCHW
    out = jnp.transpose(out_flat.reshape(B, Ho, Wo, Cout), (0, 3, 1, 2))
    return out


# ----------------------------------------------------------------------------
# Plain-JAX reference (for sanity check)
# ----------------------------------------------------------------------------
def reference_forward(x, w, b):
    B, Cin, H, W = x.shape
    Hc, Wc = H - 2, W - 2
    xcrop = x[:, :, 1:H - 1, 1:W - 1]
    y = jnp.einsum('bchw,cd->bdhw', xcrop, w[:, :, 0, 0]) + b[None, :, None, None]
    ah = jnp.asarray(_axis_matrix(2 * Hc, Hc))
    aw = jnp.asarray(_axis_matrix(2 * Wc, Wc))
    v2 = jnp.einsum('Hh,bchw,Ww->bcHW', ah, y, aw)
    return v2 * jnp.clip(v2 + 3.0, 0.0, 6.0) / 6.0


if __name__ == "__main__":
    key = jax.random.PRNGKey(0)
    k1, k2, k3 = jax.random.split(key, 3)

    B, Cin, Cout, H, W = 2, 384, 512, 10, 10   # small spatial; channels fixed by the module
    x = jax.random.normal(k1, (B, Cin, H, W), jnp.float32)
    w = jax.random.normal(k2, (Cin, Cout, 1, 1), jnp.float32) * 0.02
    b = jax.random.normal(k3, (Cout,), jnp.float32) * 0.02

    out = jax.jit(model_forward)(x, w, b)
    jax.block_until_ready(out)

    ref = reference_forward(x, w, b)
    assert out.shape == (B, Cout, 2 * (H - 2), 2 * (W - 2))
    np.testing.assert_allclose(np.asarray(out), np.asarray(ref), atol=5e-2, rtol=5e-2)

    print("KERNEL_OK")
</pallas_src>

<mosaic_0001>
module attributes {stable_mosaic.version = 11 : i64} {
  func.func @fused_kernel(%arg0: i32, %arg1: memref<1x64x384xf32, #tpu.memory_space<vmem>>, %arg2: memref<384x512xf32, #tpu.memory_space<vmem>>, %arg3: memref<1x512xf32, #tpu.memory_space<vmem>>, %arg4: memref<256x64xf32, #tpu.memory_space<vmem>>, %arg5: memref<1x256x512xf32, #tpu.memory_space<vmem>>) attributes {dimension_semantics = [#tpu.dimension_semantics<parallel>], iteration_bounds = array<i64: 2>, scalar_prefetch = 0 : i64, scratch_operands = 0 : i64, tpu.core_type = #tpu.core_type<tc>, window_params = [{transform_indices = @transform_0, window_bounds = array<i64: 1, 64, 384>}, {pipeline_mode = #tpu.pipeline_mode<synchronous>, transform_indices = @transform_1, window_bounds = array<i64: 384, 512>}, {pipeline_mode = #tpu.pipeline_mode<synchronous>, transform_indices = @transform_2, window_bounds = array<i64: 1, 512>}, {pipeline_mode = #tpu.pipeline_mode<synchronous>, transform_indices = @transform_3, window_bounds = array<i64: 256, 64>}, {transform_indices = @transform_4, window_bounds = array<i64: 1, 256, 512>}]} {
    %c0 = arith.constant 0 : index
    %c0_0 = arith.constant 0 : index
    %c0_1 = arith.constant 0 : index
    %0 = vector.load %arg1[%c0, %c0_0, %c0_1] : memref<1x64x384xf32, #tpu.memory_space<vmem>>, vector<1x64x384xf32>
    %1 = vector.shape_cast %0 : vector<1x64x384xf32> to vector<64x384xf32>
    %c0_2 = arith.constant 0 : index
    %c0_3 = arith.constant 0 : index
    %2 = vector.load %arg2[%c0_2, %c0_3] : memref<384x512xf32, #tpu.memory_space<vmem>>, vector<384x512xf32>
    %cst = arith.constant dense<0.000000e+00> : vector<64x512xf32>
    %3 = tpu.matmul %1, %2, %cst {dimension_numbers = #tpu.dot_dimension_numbers<[1], [0], [0], [1], [0, 0, 1, 1], [], []>} : vector<64x384xf32>, vector<384x512xf32>, vector<64x512xf32> -> vector<64x512xf32>
    %c0_4 = arith.constant 0 : index
    %c0_5 = arith.constant 0 : index
    %4 = vector.load %arg3[%c0_4, %c0_5] : memref<1x512xf32, #tpu.memory_space<vmem>>, vector<1x512xf32>
    %5 = vector.broadcast %4 : vector<1x512xf32> to vector<64x512xf32>
    %6 = arith.addf %3, %5 : vector<64x512xf32>
    %c0_6 = arith.constant 0 : index
    %c0_7 = arith.constant 0 : index
    %7 = vector.load %arg4[%c0_6, %c0_7] : memref<256x64xf32, #tpu.memory_space<vmem>>, vector<256x64xf32>
    %cst_8 = arith.constant dense<0.000000e+00> : vector<256x512xf32>
    %8 = tpu.matmul %7, %6, %cst_8 {dimension_numbers = #tpu.dot_dimension_numbers<[1], [0], [0], [1], [0, 0, 1, 1], [], []>} : vector<256x64xf32>, vector<64x512xf32>, vector<256x512xf32> -> vector<256x512xf32>
    %cst_9 = arith.constant 3.000000e+00 : f32
    %9 = vector.broadcast %cst_9 : f32 to vector<256x512xf32>
    %10 = arith.addf %8, %9 : vector<256x512xf32>
    %cst_10 = arith.constant 0.000000e+00 : f32
    %cst_11 = arith.constant 6.000000e+00 : f32
    %11 = vector.broadcast %cst_10 : f32 to vector<256x512xf32>
    %12 = arith.maximumf %11, %10 : vector<256x512xf32>
    %13 = vector.broadcast %cst_11 : f32 to vector<256x512xf32>
    %14 = arith.minimumf %13, %12 : vector<256x512xf32>
    %15 = arith.mulf %8, %14 : vector<256x512xf32>
    %cst_12 = arith.constant 0.166666672 : f32
    %16 = vector.broadcast %cst_12 : f32 to vector<256x512xf32>
    %17 = arith.mulf %15, %16 : vector<256x512xf32>
    %c0_13 = arith.constant 0 : index
    %c0_14 = arith.constant 0 : index
    %c0_15 = arith.constant 0 : index
    %18 = vector.load %arg5[%c0_13, %c0_14, %c0_15] : memref<1x256x512xf32, #tpu.memory_space<vmem>>, vector<1x256x512xf32>
    %19 = vector.shape_cast %18 : vector<1x256x512xf32> to vector<256x512xf32>
    %20 = vector.shape_cast %17 : vector<256x512xf32> to vector<1x256x512xf32>
    tpu.vector_store %arg5[%c0_13, %c0_14, %c0_15], %20 {strides = array<i32>} : memref<1x256x512xf32, #tpu.memory_space<vmem>>, vector<1x256x512xf32>,
    return
  }
  func.func @transform_0(%arg0: i32) -> (i32, i32, i32) {
    %c0_i32 = arith.constant 0 : i32
    %c0_i32_0 = arith.constant 0 : i32
    %c0_i32_1 = arith.constant 0 : i32
    return %arg0, %c0_i32, %c0_i32_0 : i32, i32, i32
  }
  func.func @transform_1(%arg0: i32) -> (i32, i32) {
    %c0_i32 = arith.constant 0 : i32
    %c0_i32_0 = arith.constant 0 : i32
    %c0_i32_1 = arith.constant 0 : i32
    return %c0_i32, %c0_i32_0 : i32, i32
  }
  func.func @transform_2(%arg0: i32) -> (i32, i32) {
    %c0_i32 = arith.constant 0 : i32
    %c0_i32_0 = arith.constant 0 : i32
    %c0_i32_1 = arith.constant 0 : i32
    return %c0_i32, %c0_i32_0 : i32, i32
  }
  func.func @transform_3(%arg0: i32) -> (i32, i32) {
    %c0_i32 = arith.constant 0 : i32
    %c0_i32_0 = arith.constant 0 : i32
    %c0_i32_1 = arith.constant 0 : i32
    return %c0_i32, %c0_i32_0 : i32, i32
  }
  func.func @transform_4(%arg0: i32) -> (i32, i32, i32) {
    %c0_i32 = arith.constant 0 : i32
    %c0_i32_0 = arith.constant 0 : i32
    %c0_i32_1 = arith.constant 0 : i32
    return %arg0, %c0_i32, %c0_i32_0 : i32, i32, i32
  }
}

</mosaic_0001>

<llo_original>
// kernel: model_forward.1
$region0: #{model_forward.1}
  #allocation0 [shape = 'u32[]', space=smem, size = 0x4, offset = 0x4, fixed_abs, tag = 'smem constant byte address 0x4 - core index']
  #allocation1 [shape = 'u32[72,128]{1,0:T(1,128)}', space=vmem, size = 0x9000, scoped, tag = 'internal scratch']
  %s0 = inlined_call_operand.vmem [shape: f32[2,64,384], index: 0, kind: input, shape index: {}]
  %s1 = inlined_call_operand.vmem [shape: f32[384,512], index: 1, kind: input, shape index: {}]
  %s2 = inlined_call_operand.vmem [shape: f32[1,512], index: 2, kind: input, shape index: {}]
  %s3 = inlined_call_operand.vmem [shape: f32[256,64], index: 3, kind: input, shape index: {}]
  %s4 = inlined_call_operand.hbm [shape: f32[2,256,512], index: 4, kind: output, shape index: {}]
  %s5 = sld [smem:[#allocation0]]
  $region49: #{model_forward.1} parent=0
    _
  %s7 = ssub.s32 1, %s5
  %s8 = scalar_select 0, %s7, %s5
  $region1: #{model_forward.1} parent=0
    #allocation2 [shape = 'u8[1048576]{0}', space=vmem, size = 0x100000, scoped, tag = 'output window, operand 0']
    #allocation3 [shape = 's32[2]{0}', space=sflag, size = 0x8, scoped, tag = 'scoped memory for model_forward.1']
    %9 = vsyncpa [#allocation3], 0
    %s10 = scalar_lea.sflag [#allocation3], 1
    %11 = vsyncpa %s10, 0
    loop: start=0, step=1, limit=4
    $region2: #{model_forward.1} parent=1 // loop_pre_header
      _
    $region3: #{model_forward.1} parent=1 // loop_header
      %s13 = sphi 0, %s17
      %p14 = scmp.ge.s32.totalorder %s13, 4
      %s23 = sphi 0, %s25
      %s26 = sphi 0, %s23
      %s27 = sphi 0, %s26
      %s43 = sphi 0, %s27
      %s47 = sphi 0, %s47
      %s49 = sphi 0, %s47
      %s50 = sphi 0, %s49
      %s64 = sphi 0, %s50
      %s68 = sphi 0, %s68
      %s70 = sphi 0, %s68
      %s71 = sphi 0, %s70
      %s85 = sphi 0, %s71
      %s89 = sphi 0, %s89
      %s91 = sphi 0, %s89
      %s92 = sphi 0, %s91
      %s106 = sphi 0, %s92
      %s112 = sphi 0, %s114
      %s115 = sphi 0, %s112
      %s116 = sphi 0, %s115
      %s132 = sphi 0, %s116
    $region4: #{model_forward.1} parent=1 // loop_header_branch
      %16 = sbr.rel (%p14) target = $region8
    $region5: #{model_forward.1} parent=1 // loop_body
      %s18 = ssub.s32 %s13, 1
      %s19 = ssub.s32 %s13, 2
      %s20 = sadd.s32 %s13, 1
      %s21 = ssub.s32 %s13, %s20
      %p22 = scmp.eq.s32.totalorder %s21, 0
      %s24 = sadd.s32 %s23, 1
      %s25 = scalar_select %p22, %s23, %s24
      %p28 = pneg %p22
      %p29 = scmp.eq.s32.totalorder %s13, 1
      %p30 = por %p28, %p29
      %p31 = scmp.ne.s32.totalorder %s23, %s26
      %p32 = scmp.eq.s32.totalorder %s13, 0
      %p33 = por %p31, %p32
      %p34 = scmp.ne.s32.totalorder %s23, %s26
      %p35 = scmp.eq.s32.totalorder %s18, 1
      %p36 = por %p34, %p35
      %p37 = scmp.ne.s32.totalorder %s26, %s27
      %p38 = scmp.eq.s32.totalorder %s18, 0
      %p39 = por %p37, %p38
      %p40 = scmp.ne.s32.totalorder %s26, %s27
      %p41 = scmp.eq.s32.totalorder %s19, 1
      %p42 = por %p40, %p41
      %p44 = scmp.ne.s32.totalorder %s27, %s43
      %p45 = scmp.eq.s32.totalorder %s19, 0
      %p46 = por %p44, %p45
      %s48 = sadd.s32 %s47, 1
      %p51 = scmp.eq.s32.totalorder %s13, 1
      %p52 = scmp.ne.s32.totalorder %s47, %s49
      %p53 = scmp.eq.s32.totalorder %s13, 0
      %p54 = por %p52, %p53
      %p55 = scmp.ne.s32.totalorder %s47, %s49
      %p56 = scmp.eq.s32.totalorder %s18, 1
      %p57 = por %p55, %p56
      %p58 = scmp.ne.s32.totalorder %s49, %s50
      %p59 = scmp.eq.s32.totalorder %s18, 0
      %p60 = por %p58, %p59
      %p61 = scmp.ne.s32.totalorder %s49, %s50
      %p62 = scmp.eq.s32.totalorder %s19, 1
      %p63 = por %p61, %p62
      %p65 = scmp.ne.s32.totalorder %s50, %s64
      %p66 = scmp.eq.s32.totalorder %s19, 0
      %p67 = por %p65, %p66
      %s69 = sadd.s32 %s68, 1
      %p72 = scmp.eq.s32.totalorder %s13, 1
      %p73 = scmp.ne.s32.totalorder %s68, %s70
      %p74 = scmp.eq.s32.totalorder %s13, 0
      %p75 = por %p73, %p74
      %p76 = scmp.ne.s32.totalorder %s68, %s70
      %p77 = scmp.eq.s32.totalorder %s18, 1
      %p78 = por %p76, %p77
      %p79 = scmp.ne.s32.totalorder %s70, %s71
      %p80 = scmp.eq.s32.totalorder %s18, 0
      %p81 = por %p79, %p80
      %p82 = scmp.ne.s32.totalorder %s70, %s71
      %p83 = scmp.eq.s32.totalorder %s19, 1
      %p84 = por %p82, %p83
      %p86 = scmp.ne.s32.totalorder %s71, %s85
      %p87 = scmp.eq.s32.totalorder %s19, 0
      %p88 = por %p86, %p87
      %s90 = sadd.s32 %s89, 1
      %p93 = scmp.eq.s32.totalorder %s13, 1
      %p94 = scmp.ne.s32.totalorder %s89, %s91
      %p95 = scmp.eq.s32.totalorder %s13, 0
      %p96 = por %p94, %p95
      %p97 = scmp.ne.s32.totalorder %s89, %s91
      %p98 = scmp.eq.s32.totalorder %s18, 1
      %p99 = por %p97, %p98
      %p100 = scmp.ne.s32.totalorder %s91, %s92
      %p101 = scmp.eq.s32.totalorder %s18, 0
      %p102 = por %p100, %p101
      %p103 = scmp.ne.s32.totalorder %s91, %s92
      %p104 = scmp.eq.s32.totalorder %s19, 1
      %p105 = por %p103, %p104
      %p107 = scmp.ne.s32.totalorder %s92, %s106
      %p108 = scmp.eq.s32.totalorder %s19, 0
      %p109 = por %p107, %p108
      %s110 = ssub.s32 %s13, %s20
      %p111 = scmp.eq.s32.totalorder %s110, 0
      %s113 = sadd.s32 %s112, 1
      %s114 = scalar_select %p111, %s112, %s113
      %p117 = pneg %p111
      %p118 = scmp.eq.s32.totalorder %s13, 1
      %p119 = por %p117, %p118
      %p120 = scmp.ne.s32.totalorder %s112, %s115
      %p121 = scmp.eq.s32.totalorder %s13, 0
      %p122 = por %p120, %p121
      %p123 = scmp.ne.s32.totalorder %s112, %s115
      %p124 = scmp.eq.s32.totalorder %s18, 1
      %p125 = por %p123, %p124
      %p126 = scmp.ne.s32.totalorder %s115, %s116
      %p127 = scmp.eq.s32.totalorder %s18, 0
      %p128 = por %p126, %p127
      %p129 = scmp.ne.s32.totalorder %s115, %s116
      %p130 = scmp.eq.s32.totalorder %s19, 1
      %p131 = por %p129, %p130
      %p133 = scmp.ne.s32.totalorder %s116, %s132
      %p134 = scmp.eq.s32.totalorder %s19, 0
      %p135 = por %p133, %p134
      %p136 = scmp.le.s32.totalorder 1, %s13
      %p137 = scmp.lt.s32.totalorder %s13, 3
      %p138 = pnand %p136, %p137
      %p139 = pneg %p138
      // Predicated region
      $region9: #{model_forward.1} parent=5 // pred_check
        _
      $region10: #{model_forward.1} parent=5 // pred_check_branch
        %141 = sbr.rel (%p138) target = $region12
      $region11: #{model_forward.1} parent=5 // pred_region
        %s142 = ssub.s32 %s13, 1
        // Predicated region
        $region13: #{model_forward.1} parent=11 // pred_check
          %p143 = pneg %p60
        $region14: #{model_forward.1} parent=11 // pred_check_branch
          %145 = sbr.rel (%p143) target = $region16
        $region15: #{model_forward.1} parent=11 // pred_region
          _
        $region16: #{model_forward.1} parent=11 // pred_fallthru
          _
        // Predicated region
        $region17: #{model_forward.1} parent=11 // pred_check
          %p146 = pneg %p81
        $region18: #{model_forward.1} parent=11 // pred_check_branch
          %148 = sbr.rel (%p146) target = $region20
        $region19: #{model_forward.1} parent=11 // pred_region
          _
        $region20: #{model_forward.1} parent=11 // pred_fallthru
          _
        // Predicated region
        $region21: #{model_forward.1} parent=11 // pred_check
          %p149 = pneg %p102
        $region22: #{model_forward.1} parent=11 // pred_check_branch
          %151 = sbr.rel (%p149) target = $region24
        $region23: #{model_forward.1} parent=11 // pred_region
          _
        $region24: #{model_forward.1} parent=11 // pred_fallthru
          _
      $region12: #{model_forward.1} parent=5 // pred_fallthru
        _
      %p152 = scmp.lt.s32.totalorder %s13, 2
      // Predicated region
      $region25: #{model_forward.1} parent=5 // pred_check
        %p153 = pneg %p152
      $region26: #{model_forward.1} parent=5 // pred_check_branch
        %155 = sbr.rel (%p153) target = $region28
      $region27: #{model_forward.1} parent=5 // pred_region
        // Predicated region
        $region29: #{model_forward.1} parent=27 // pred_check
          %p156 = pneg %p33
        $region30: #{model_forward.1} parent=27 // pred_check_branch
          %158 = sbr.rel (%p156) target = $region32
        $region31: #{model_forward.1} parent=27 // pred_region
          %p159 = scmp.lt.s32.totalorder %s13, 1
          %s160 = scalar_select %p159, %s13, 1
          %s161 = smul.addr %s160, 24
          %s162 = smul.addr %s161, 8
          %s163 = scalar_lea.vmem %s0, %s162
        $region32: #{model_forward.1} parent=27 // pred_fallthru
          _
      $region28: #{model_forward.1} parent=5 // pred_fallthru
        _
      %p164 = scmp.le.s32.totalorder 1, %s13
      %p165 = scmp.lt.s32.totalorder %s13, 3
      %p166 = pnand %p164, %p165
      %p167 = pneg %p166
      // Predicated region
      $region33: #{model_forward.1} parent=5 // pred_check
        _
      $region34: #{model_forward.1} parent=5 // pred_check_branch
        %169 = sbr.rel (%p166) target = $region36
      $region35: #{model_forward.1} parent=5 // pred_region
        %s170 = ssub.s32 %s13, 1
        %p171 = scmp.lt.s32.totalorder %s18, 1
        %s172 = scalar_select %p171, %s18, 1
        %s173 = smul.addr %s172, 24
        %s174 = smul.addr %s173, 8
        %s175 = scalar_lea.vmem %s0, %s174
        %p176 = pneg %p39
        %p177 = pneg %p36
        %p178 = pneg %p60
        %p179 = pneg %p57
        %p180 = pneg %p81
        %p181 = pneg %p78
        %p182 = pneg %p102
        %p183 = pneg %p99
        %p184 = pneg %p128
        %p185 = pneg %p125
        %s186 = sand.u32 %s115, 1
        %s187 = scalar_lea.sflag [#allocation3], %s186
        %s188 = sand.u32 %s115, 1
        %s189 = smul.addr %s188, 1024
        %s190 = scalar_lea.vmem [#allocation2], %s189
        %p191 = scmp.lt.s32.totalorder %s18, 1
        %s192 = scalar_select %p191, %s18, 1
        %s193 = smul.addr %s192, 24
        %s194 = smul.addr %s193, 8
        %s195 = scalar_lea.vmem %s0, %s194
        %v196 = vld [vmem:[%s195] sm:$0xff]
        %v197 = vld [vmem:[%s195 + $0x8] sm:$0xff]
        %v198 = vld [vmem:[%s195 + $0x10] sm:$0xff]
        %v199 = vld [vmem:[%s195 + $0x18] sm:$0xff]
        %v200 = vld [vmem:[%s195 + $0x20] sm:$0xff]
        %v201 = vld [vmem:[%s195 + $0x28] sm:$0xff]
        %v202 = vld [vmem:[%s195 + $0x30] sm:$0xff]
        %v203 = vld [vmem:[%s195 + $0x38] sm:$0xff]
        %v204 = vld [vmem:[%s195 + $0x40] sm:$0xff]
        %v205 = vld [vmem:[%s195 + $0x48] sm:$0xff]
        %v206 = vld [vmem:[%s195 + $0x50] sm:$0xff]
        %v207 = vld [vmem:[%s195 + $0x58] sm:$0xff]
        %v208 = vld [vmem:[%s195 + $0x60] sm:$0xff]
        %v209 = vld [vmem:[%s195 + $0x68] sm:$0xff]
        %v210 = vld [vmem:[%s195 + $0x70] sm:$0xff]
        %v211 = vld [vmem:[%s195 + $0x78] sm:$0xff]
        %v212 = vld [vmem:[%s195 + $0x80] sm:$0xff]
        %v213 = vld [vmem:[%s195 + $0x88] sm:$0xff]
        %v214 = vld [vmem:[%s195 + $0x90] sm:$0xff]
        %v215 = vld [vmem:[%s195 + $0x98] sm:$0xff]
        %v216 = vld [vmem:[%s195 + $0xa0] sm:$0xff]
        %v217 = vld [vmem:[%s195 + $0xa8] sm:$0xff]
        %v218 = vld [vmem:[%s195 + $0xb0] sm:$0xff]
        %v219 = vld [vmem:[%s195 + $0xb8] sm:$0xff]
        %v220 = vld [vmem:[%s1] sm:$0xff]
        %v221 = vld [vmem:[%s1 + $0x8] sm:$0xff]
        %v222 = vld [vmem:[%s1 + $0x10] sm:$0xff]
        %v223 = vld [vmem:[%s1 + $0x18] sm:$0xff]
        %v224 = vld [vmem:[%s1 + $0x20] sm:$0xff]
        %v225 = vld [vmem:[%s1 + $0x28] sm:$0xff]
        %v226 = vld [vmem:[%s1 + $0x30] sm:$0xff]
        %v227 = vld [vmem:[%s1 + $0x38] sm:$0xff]
        %v228 = vld [vmem:[%s1 + $0x40] sm:$0xff]
        %v229 = vld [vmem:[%s1 + $0x48] sm:$0xff]
        %v230 = vld [vmem:[%s1 + $0x50] sm:$0xff]
        %v231 = vld [vmem:[%s1 + $0x58] sm:$0xff]
        %v232 = vld [vmem:[%s1 + $0x60] sm:$0xff]
        %v233 = vld [vmem:[%s1 + $0x68] sm:$0xff]
        %v234 = vld [vmem:[%s1 + $0x70] sm:$0xff]
        %v235 = vld [vmem:[%s1 + $0x78] sm:$0xff]
        %v236 = vld [vmem:[%s1 + $0x80] sm:$0xff]
        %v237 = vld [vmem:[%s1 + $0x88] sm:$0xff]
        %v238 = vld [vmem:[%s1 + $0x90] sm:$0xff]
        %v239 = vld [vmem:[%s1 + $0x98] sm:$0xff]
        %v240 = vld [vmem:[%s1 + $0xa0] sm:$0xff]
        %v241 = vld [vmem:[%s1 + $0xa8] sm:$0xff]
        %v242 = vld [vmem:[%s1 + $0xb0] sm:$0xff]
        %v243 = vld [vmem:[%s1 + $0xb8] sm:$0xff]
        %v244 = vld [vmem:[%s1 + $0xc0] sm:$0xff]
        %v245 = vld [vmem:[%s1 + $0xc8] sm:$0xff]
        %v246 = vld [vmem:[%s1 + $0xd0] sm:$0xff]
        %v247 = vld [vmem:[%s1 + $0xd8] sm:$0xff]
        %v248 = vld [vmem:[%s1 + $0xe0] sm:$0xff]
        %v249 = vld [vmem:[%s1 + $0xe8] sm:$0xff]
        %v250 = vld [vmem:[%s1 + $0xf0] sm:$0xff]
        %v251 = vld [vmem:[%s1 + $0xf8] sm:$0xff]
        %v252 = vld [vmem:[%s1 + $0x100] sm:$0xff]
        %v253 = vld [vmem:[%s1 + $0x108] sm:$0xff]
        %v254 = vld [vmem:[%s1 + $0x110] sm:$0xff]
        %v255 = vld [vmem:[%s1 + $0x118] sm:$0xff]
        %v256 = vld [vmem:[%s1 + $0x120] sm:$0xff]
        %v257 = vld [vmem:[%s1 + $0x128] sm:$0xff]
        %v258 = vld [vmem:[%s1 + $0x130] sm:$0xff]
        %v259 = vld [vmem:[%s1 + $0x138] sm:$0xff]
        %v260 = vld [vmem:[%s1 + $0x140] sm:$0xff]
        %v261 = vld [vmem:[%s1 + $0x148] sm:$0xff]
        %v262 = vld [vmem:[%s1 + $0x150] sm:$0xff]
        %v263 = vld [vmem:[%s1 + $0x158] sm:$0xff]
        %v264 = vld [vmem:[%s1 + $0x160] sm:$0xff]
        %v265 = vld [vmem:[%s1 + $0x168] sm:$0xff]
        %v266 = vld [vmem:[%s1 + $0x170] sm:$0xff]
        %v267 = vld [vmem:[%s1 + $0x178] sm:$0xff]
        %v268 = vld [vmem:[%s1 + $0x180] sm:$0xff]
        %v269 = vld [vmem:[%s1 + $0x188] sm:$0xff]
        %v270 = vld [vmem:[%s1 + $0x190] sm:$0xff]
        %v271 = vld [vmem:[%s1 + $0x198] sm:$0xff]
        %v272 = vld [vmem:[%s1 + $0x1a0] sm:$0xff]
        %v273 = vld [vmem:[%s1 + $0x1a8] sm:$0xff]
        %v274 = vld [vmem:[%s1 + $0x1b0] sm:$0xff]
        %v275 = vld [vmem:[%s1 + $0x1b8] sm:$0xff]
        %v276 = vld [vmem:[%s1 + $0x1c0] sm:$0xff]
        %v277 = vld [vmem:[%s1 + $0x1c8] sm:$0xff]
        %v278 = vld [vmem:[%s1 + $0x1d0] sm:$0xff]
        %v279 = vld [vmem:[%s1 + $0x1d8] sm:$0xff]
        %v280 = vld [vmem:[%s1 + $0x1e0] sm:$0xff]
        %v281 = vld [vmem:[%s1 + $0x1e8] sm:$0xff]
        %v282 = vld [vmem:[%s1 + $0x1f0] sm:$0xff]
        %v283 = vld [vmem:[%s1 + $0x1f8] sm:$0xff]
        %v284 = vld [vmem:[%s1 + $0x200] sm:$0xff]
        %v285 = vld [vmem:[%s1 + $0x208] sm:$0xff]
        %v286 = vld [vmem:[%s1 + $0x210] sm:$0xff]
        %v287 = vld [vmem:[%s1 + $0x218] sm:$0xff]
        %v288 = vld [vmem:[%s1 + $0x220] sm:$0xff]
        %v289 = vld [vmem:[%s1 + $0x228] sm:$0xff]
        %v290 = vld [vmem:[%s1 + $0x230] sm:$0xff]
        %v291 = vld [vmem:[%s1 + $0x238] sm:$0xff]
        %v292 = vld [vmem:[%s1 + $0x240] sm:$0xff]
        %v293 = vld [vmem:[%s1 + $0x248] sm:$0xff]
        %v294 = vld [vmem:[%s1 + $0x250] sm:$0xff]
        %v295 = vld [vmem:[%s1 + $0x258] sm:$0xff]
        %v296 = vld [vmem:[%s1 + $0x260] sm:$0xff]
        %v297 = vld [vmem:[%s1 + $0x268] sm:$0xff]
        %v298 = vld [vmem:[%s1 + $0x270] sm:$0xff]
        %v299 = vld [vmem:[%s1 + $0x278] sm:$0xff]
        %v300 = vld [vmem:[%s1 + $0x280] sm:$0xff]
        %v301 = vld [vmem:[%s1 + $0x288] sm:$0xff]
        %v302 = vld [vmem:[%s1 + $0x290] sm:$0xff]
        %v303 = vld [vmem:[%s1 + $0x298] sm:$0xff]
        %v304 = vld [vmem:[%s1 + $0x2a0] sm:$0xff]
        %v305 = vld [vmem:[%s1 + $0x2a8] sm:$0xff]
        %v306 = vld [vmem:[%s1 + $0x2b0] sm:$0xff]
        %v307 = vld [vmem:[%s1 + $0x2b8] sm:$0xff]
        %v308 = vld [vmem:[%s1 + $0x2c0] sm:$0xff]
        %v309 = vld [vmem:[%s1 + $0x2c8] sm:$0xff]
        %v310 = vld [vmem:[%s1 + $0x2d0] sm:$0xff]
        %v311 = vld [vmem:[%s1 + $0x2d8] sm:$0xff]
        %v312 = vld [vmem:[%s1 + $0x2e0] sm:$0xff]
        %v313 = vld [vmem:[%s1 + $0x2e8] sm:$0xff]
        %v314 = vld [vmem:[%s1 + $0x2f0] sm:$0xff]
        %v315 = vld [vmem:[%s1 + $0x2f8] sm:$0xff]
        %v316 = vld [vmem:[%s1 + $0x300] sm:$0xff]
        %v317 = vld [vmem:[%s1 + $0x308] sm:$0xff]
        %v318 = vld [vmem:[%s1 + $0x310] sm:$0xff]
        %v319 = vld [vmem:[%s1 + $0x318] sm:$0xff]
        %v320 = vld [vmem:[%s1 + $0x320] sm:$0xff]
        %v321 = vld [vmem:[%s1 + $0x328] sm:$0xff]
        %v322 = vld [vmem:[%s1 + $0x330] sm:$0xff]
        %v323 = vld [vmem:[%s1 + $0x338] sm:$0xff]
        %v324 = vld [vmem:[%s1 + $0x340] sm:$0xff]
        %v325 = vld [vmem:[%s1 + $0x348] sm:$0xff]
        %v326 = vld [vmem:[%s1 + $0x350] sm:$0xff]
        %v327 = vld [vmem:[%s1 + $0x358] sm:$0xff]
        %v328 = vld [vmem:[%s1 + $0x360] sm:$0xff]
        %v329 = vld [vmem:[%s1 + $0x368] sm:$0xff]
        %v330 = vld [vmem:[%s1 + $0x370] sm:$0xff]
        %v331 = vld [vmem:[%s1 + $0x378] sm:$0xff]
        %v332 = vld [vmem:[%s1 + $0x380] sm:$0xff]
        %v333 = vld [vmem:[%s1 + $0x388] sm:$0xff]
        %v334 = vld [vmem:[%s1 + $0x390] sm:$0xff]
        %v335 = vld [vmem:[%s1 + $0x398] sm:$0xff]
        %v336 = vld [vmem:[%s1 + $0x3a0] sm:$0xff]
        %v337 = vld [vmem:[%s1 + $0x3a8] sm:$0xff]
        %v338 = vld [vmem:[%s1 + $0x3b0] sm:$0xff]
        %v339 = vld [vmem:[%s1 + $0x3b8] sm:$0xff]
        %v340 = vld [vmem:[%s1 + $0x3c0] sm:$0xff]
        %v341 = vld [vmem:[%s1 + $0x3c8] sm:$0xff]
        %v342 = vld [vmem:[%s1 + $0x3d0] sm:$0xff]
        %v343 = vld [vmem:[%s1 + $0x3d8] sm:$0xff]
        %v344 = vld [vmem:[%s1 + $0x3e0] sm:$0xff]
        %v345 = vld [vmem:[%s1 + $0x3e8] sm:$0xff]
        %v346 = vld [vmem:[%s1 + $0x3f0] sm:$0xff]
        %v347 = vld [vmem:[%s1 + $0x3f8] sm:$0xff]
        %v348 = vld [vmem:[%s1 + $0x400] sm:$0xff]
        %v349 = vld [vmem:[%s1 + $0x408] sm:$0xff]
        %v350 = vld [vmem:[%s1 + $0x410] sm:$0xff]
        %v351 = vld [vmem:[%s1 + $0x418] sm:$0xff]
        %v352 = vld [vmem:[%s1 + $0x420] sm:$0xff]
        %v353 = vld [vmem:[%s1 + $0x428] sm:$0xff]
        %v354 = vld [vmem:[%s1 + $0x430] sm:$0xff]
        %v355 = vld [vmem:[%s1 + $0x438] sm:$0xff]
        %v356 = vld [vmem:[%s1 + $0x440] sm:$0xff]
        %v357 = vld [vmem:[%s1 + $0x448] sm:$0xff]
        %v358 = vld [vmem:[%s1 + $0x450] sm:$0xff]
        %v359 = vld [vmem:[%s1 + $0x458] sm:$0xff]
        %v360 = vld [vmem:[%s1 + $0x460] sm:$0xff]
        %v361 = vld [vmem:[%s1 + $0x468] sm:$0xff]
        %v362 = vld [vmem:[%s1 + $0x470] sm:$0xff]
        %v363 = vld [vmem:[%s1 + $0x478] sm:$0xff]
        %v364 = vld [vmem:[%s1 + $0x480] sm:$0xff]
        %v365 = vld [vmem:[%s1 + $0x488] sm:$0xff]
        %v366 = vld [vmem:[%s1 + $0x490] sm:$0xff]
        %v367 = vld [vmem:[%s1 + $0x498] sm:$0xff]
        %v368 = vld [vmem:[%s1 + $0x4a0] sm:$0xff]
        %v369 = vld [vmem:[%s1 + $0x4a8] sm:$0xff]
        %v370 = vld [vmem:[%s1 + $0x4b0] sm:$0xff]
        %v371 = vld [vmem:[%s1 + $0x4b8] sm:$0xff]
        %v372 = vld [vmem:[%s1 + $0x4c0] sm:$0xff]
        %v373 = vld [vmem:[%s1 + $0x4c8] sm:$0xff]
        %v374 = vld [vmem:[%s1 + $0x4d0] sm:$0xff]
        %v375 = vld [vmem:[%s1 + $0x4d8] sm:$0xff]
        %v376 = vld [vmem:[%s1 + $0x4e0] sm:$0xff]
        %v377 = vld [vmem:[%s1 + $0x4e8] sm:$0xff]
        %v378 = vld [vmem:[%s1 + $0x4f0] sm:$0xff]
        %v379 = vld [vmem:[%s1 + $0x4f8] sm:$0xff]
        %v380 = vld [vmem:[%s1 + $0x500] sm:$0xff]
        %v381 = vld [vmem:[%s1 + $0x508] sm:$0xff]
        %v382 = vld [vmem:[%s1 + $0x510] sm:$0xff]
        %v383 = vld [vmem:[%s1 + $0x518] sm:$0xff]
        %v384 = vld [vmem:[%s1 + $0x520] sm:$0xff]
        %v385 = vld [vmem:[%s1 + $0x528] sm:$0xff]
        %v386 = vld [vmem:[%s1 + $0x530] sm:$0xff]
        %v387 = vld [vmem:[%s1 + $0x538] sm:$0xff]
        %v388 = vld [vmem:[%s1 + $0x540] sm:$0xff]
        %v389 = vld [vmem:[%s1 + $0x548] sm:$0xff]
        %v390 = vld [vmem:[%s1 + $0x550] sm:$0xff]
        %v391 = vld [vmem:[%s1 + $0x558] sm:$0xff]
        %v392 = vld [vmem:[%s1 + $0x560] sm:$0xff]
        %v393 = vld [vmem:[%s1 + $0x568] sm:$0xff]
        %v394 = vld [vmem:[%s1 + $0x570] sm:$0xff]
        %v395 = vld [vmem:[%s1 + $0x578] sm:$0xff]
        %v396 = vld [vmem:[%s1 + $0x580] sm:$0xff]
        %v397 = vld [vmem:[%s1 + $0x588] sm:$0xff]
        %v398 = vld [vmem:[%s1 + $0x590] sm:$0xff]
        %v399 = vld [vmem:[%s1 + $0x598] sm:$0xff]
        %v400 = vld [vmem:[%s1 + $0x5a0] sm:$0xff]
        %v401 = vld [vmem:[%s1 + $0x5a8] sm:$0xff]
        %v402 = vld [vmem:[%s1 + $0x5b0] sm:$0xff]
        %v403 = vld [vmem:[%s1 + $0x5b8] sm:$0xff]
        %v404 = vld [vmem:[%s1 + $0x5c0] sm:$0xff]
        %v405 = vld [vmem:[%s1 + $0x5c8] sm:$0xff]
        %v406 = vld [vmem:[%s1 + $0x5d0] sm:$0xff]
        %v407 = vld [vmem:[%s1 + $0x5d8] sm:$0xff]
        %v408 = vld [vmem:[%s1 + $0x5e0] sm:$0xff]
        %v409 = vld [vmem:[%s1 + $0x5e8] sm:$0xff]
        %v410 = vld [vmem:[%s1 + $0x5f0] sm:$0xff]
        %v411 = vld [vmem:[%s1 + $0x5f8] sm:$0xff]
        %v412 = vld [vmem:[%s2] sm:$0xf]
        %v414 = vperm.slane %v412, 0
        %v415 = vperm.slane %v412, 1
        %v416 = vperm.slane %v412, 2
        %v417 = vperm.slane %v412, 3
        %422 = vmatpush.msra.mxu0 %v280
        %423 = vmatpush.msra.mxu0 %v276
        %424 = vmatpush.msra.mxu0 %v272
        %425 = vmatpush.msra.mxu0 %v268
        %426 = vmatpush.msra.mxu0 %v264
        %427 = vmatpush.msra.mxu0 %v260
        %428 = vmatpush.msra.mxu0 %v256
        %429 = vmatpush.msra.mxu0 %v252
        %430 = vmatpush.msra.mxu0 %v248
        %431 = vmatpush.msra.mxu0 %v244
        %432 = vmatpush.msra.mxu0 %v240
        %433 = vmatpush.msra.mxu0 %v236
        %434 = vmatpush.msra.mxu0 %v232
        %435 = vmatpush.msra.mxu0 %v228
        %436 = vmatpush.msra.mxu0 %v224
        %437 = vmatpush.msra.mxu0 %v220
        %438 = vmatmul.f32.gmra.mxu0 %v196
        %v439 = vpop.f32.mrf.mxu0
        %v440 = vadd.f32 %v414, %v439
        %441 = vmatmul.f32.gmra.mxu0 %v199
        %v442 = vpop.f32.mrf.mxu0
        %v443 = vadd.f32 %v414, %v442
        %444 = vmatmul.f32.gmra.mxu0 %v202
        %v445 = vpop.f32.mrf.mxu0
        %v446 = vadd.f32 %v414, %v445
        %447 = vmatmul.f32.gmra.mxu0 %v205
        %v448 = vpop.f32.mrf.mxu0
        %v449 = vadd.f32 %v414, %v448
        %450 = vmatmul.f32.gmra.mxu0 %v208
        %v451 = vpop.f32.mrf.mxu0
        %v452 = vadd.f32 %v414, %v451
        %453 = vmatmul.f32.gmra.mxu0 %v211
        %v454 = vpop.f32.mrf.mxu0
        %v455 = vadd.f32 %v414, %v454
        %456 = vmatmul.f32.gmra.mxu0 %v214
        %v457 = vpop.f32.mrf.mxu0
        %v458 = vadd.f32 %v414, %v457
        %459 = vmatmul.f32.gmra.mxu0 %v217
        %v460 = vpop.f32.mrf.mxu0
        %v461 = vadd.f32 %v414, %v460
        %462 = vdwg.mxu0
        %463 = vmatpush.msra.mxu0 %v344
        %464 = vmatpush.msra.mxu0 %v340
        %465 = vmatpush.msra.mxu0 %v336
        %466 = vmatpush.msra.mxu0 %v332
        %467 = vmatpush.msra.mxu0 %v328
        %468 = vmatpush.msra.mxu0 %v324
        %469 = vmatpush.msra.mxu0 %v320
        %470 = vmatpush.msra.mxu0 %v316
        %471 = vmatpush.msra.mxu0 %v312
        %472 = vmatpush.msra.mxu0 %v308
        %473 = vmatpush.msra.mxu0 %v304
        %474 = vmatpush.msra.mxu0 %v300
        %475 = vmatpush.msra.mxu0 %v296
        %476 = vmatpush.msra.mxu0 %v292
        %477 = vmatpush.msra.mxu0 %v288
        %478 = vmatpush.msra.mxu0 %v284
        %479 = vmatmul.f32.gmra.mxu0 %v197
        %v480 = vpop.f32.mrf.mxu0
        %v481 = vadd.f32 %v440, %v480
        %482 = vmatmul.f32.gmra.mxu0 %v200
        %v483 = vpop.f32.mrf.mxu0
        %v484 = vadd.f32 %v443, %v483
        %485 = vmatmul.f32.gmra.mxu0 %v203
        %v486 = vpop.f32.mrf.mxu0
        %v487 = vadd.f32 %v446, %v486
        %488 = vmatmul.f32.gmra.mxu0 %v206
        %v489 = vpop.f32.mrf.mxu0
        %v490 = vadd.f32 %v449, %v489
        %491 = vmatmul.f32.gmra.mxu0 %v209
        %v492 = vpop.f32.mrf.mxu0
        %v493 = vadd.f32 %v452, %v492
        %494 = vmatmul.f32.gmra.mxu0 %v212
        %v495 = vpop.f32.mrf.mxu0
        %v496 = vadd.f32 %v455, %v495
        %497 = vmatmul.f32.gmra.mxu0 %v215
        %v498 = vpop.f32.mrf.mxu0
        %v499 = vadd.f32 %v458, %v498
        %500 = vmatmul.f32.gmra.mxu0 %v218
        %v501 = vpop.f32.mrf.mxu0
        %v502 = vadd.f32 %v461, %v501
        %503 = vdwg.mxu0
        %504 = vmatpush.msra.mxu0 %v408
        %505 = vmatpush.msra.mxu0 %v404
        %506 = vmatpush.msra.mxu0 %v400
        %507 = vmatpush.msra.mxu0 %v396
        %508 = vmatpush.msra.mxu0 %v392
        %509 = vmatpush.msra.mxu0 %v388
        %510 = vmatpush.msra.mxu0 %v384
        %511 = vmatpush.msra.mxu0 %v380
        %512 = vmatpush.msra.mxu0 %v376
        %513 = vmatpush.msra.mxu0 %v372
        %514 = vmatpush.msra.mxu0 %v368
        %515 = vmatpush.msra.mxu0 %v364
        %516 = vmatpush.msra.mxu0 %v360
        %517 = vmatpush.msra.mxu0 %v356
        %518 = vmatpush.msra.mxu0 %v352
        %519 = vmatpush.msra.mxu0 %v348
        %520 = vmatmul.f32.gmra.mxu0 %v198
        %v521 = vpop.f32.mrf.mxu0
        %v522 = vadd.f32 %v481, %v521
        %523 = vmatmul.f32.gmra.mxu0 %v201
        %v524 = vpop.f32.mrf.mxu0
        %v525 = vadd.f32 %v484, %v524
        %526 = vmatmul.f32.gmra.mxu0 %v204
        %v527 = vpop.f32.mrf.mxu0
        %v528 = vadd.f32 %v487, %v527
        %529 = vmatmul.f32.gmra.mxu0 %v207
        %v530 = vpop.f32.mrf.mxu0
        %v531 = vadd.f32 %v490, %v530
        %532 = vmatmul.f32.gmra.mxu0 %v210
        %v533 = vpop.f32.mrf.mxu0
        %v534 = vadd.f32 %v493, %v533
        %535 = vmatmul.f32.gmra.mxu0 %v213
        %v536 = vpop.f32.mrf.mxu0
        %v537 = vadd.f32 %v496, %v536
        %538 = vmatmul.f32.gmra.mxu0 %v216
        %v539 = vpop.f32.mrf.mxu0
        %v540 = vadd.f32 %v499, %v539
        %541 = vmatmul.f32.gmra.mxu0 %v219
        %v542 = vpop.f32.mrf.mxu0
        %v543 = vadd.f32 %v502, %v542
        %544 = vdwg.mxu0
        %545 = vmatpush.msra.mxu0 %v281
        %546 = vmatpush.msra.mxu0 %v277
        %547 = vmatpush.msra.mxu0 %v273
        %548 = vmatpush.msra.mxu0 %v269
        %549 = vmatpush.msra.mxu0 %v265
        %550 = vmatpush.msra.mxu0 %v261
        %551 = vmatpush.msra.mxu0 %v257
        %552 = vmatpush.msra.mxu0 %v253
        %553 = vmatpush.msra.mxu0 %v249
        %554 = vmatpush.msra.mxu0 %v245
        %555 = vmatpush.msra.mxu0 %v241
        %556 = vmatpush.msra.mxu0 %v237
        %557 = vmatpush.msra.mxu0 %v233
        %558 = vmatpush.msra.mxu0 %v229
        %559 = vmatpush.msra.mxu0 %v225
        %560 = vmatpush.msra.mxu0 %v221
        %561 = vmatmul.f32.gmra.mxu0 %v196
        %v562 = vpop.f32.mrf.mxu0
        %v563 = vadd.f32 %v415, %v562
        %564 = vmatmul.f32.gmra.mxu0 %v199
        %v565 = vpop.f32.mrf.mxu0
        %v566 = vadd.f32 %v415, %v565
        %567 = vmatmul.f32.gmra.mxu0 %v202
        %v568 = vpop.f32.mrf.mxu0
        %v569 = vadd.f32 %v415, %v568
        %570 = vmatmul.f32.gmra.mxu0 %v205
        %v571 = vpop.f32.mrf.mxu0
        %v572 = vadd.f32 %v415, %v571
        %573 = vmatmul.f32.gmra.mxu0 %v208
        %v574 = vpop.f32.mrf.mxu0
        %v575 = vadd.f32 %v415, %v574
        %576 = vmatmul.f32.gmra.mxu0 %v211
        %v577 = vpop.f32.mrf.mxu0
        %v578 = vadd.f32 %v415, %v577
        %579 = vmatmul.f32.gmra.mxu0 %v214
        %v580 = vpop.f32.mrf.mxu0
        %v581 = vadd.f32 %v415, %v580
        %582 = vmatmul.f32.gmra.mxu0 %v217
        %v583 = vpop.f32.mrf.mxu0
        %v584 = vadd.f32 %v415, %v583
        %585 = vdwg.mxu0
        %586 = vmatpush.msra.mxu0 %v345
        %587 = vmatpush.msra.mxu0 %v341
        %588 = vmatpush.msra.mxu0 %v337
        %589 = vmatpush.msra.mxu0 %v333
        %590 = vmatpush.msra.mxu0 %v329
        %591 = vmatpush.msra.mxu0 %v325
        %592 = vmatpush.msra.mxu0 %v321
        %593 = vmatpush.msra.mxu0 %v317
        %594 = vmatpush.msra.mxu0 %v313
        %595 = vmatpush.msra.mxu0 %v309
        %596 = vmatpush.msra.mxu0 %v305
        %597 = vmatpush.msra.mxu0 %v301
        %598 = vmatpush.msra.mxu0 %v297
        %599 = vmatpush.msra.mxu0 %v293
        %600 = vmatpush.msra.mxu0 %v289
        %601 = vmatpush.msra.mxu0 %v285
        %602 = vmatmul.f32.gmra.mxu0 %v197
        %v603 = vpop.f32.mrf.mxu0
        %v604 = vadd.f32 %v563, %v603
        %605 = vmatmul.f32.gmra.mxu0 %v200
        %v606 = vpop.f32.mrf.mxu0
        %v607 = vadd.f32 %v566, %v606
        %608 = vmatmul.f32.gmra.mxu0 %v203
        %v609 = vpop.f32.mrf.mxu0
        %v610 = vadd.f32 %v569, %v609
        %611 = vmatmul.f32.gmra.mxu0 %v206
        %v612 = vpop.f32.mrf.mxu0
        %v613 = vadd.f32 %v572, %v612
        %614 = vmatmul.f32.gmra.mxu0 %v209
        %v615 = vpop.f32.mrf.mxu0
        %v616 = vadd.f32 %v575, %v615
        %617 = vmatmul.f32.gmra.mxu0 %v212
        %v618 = vpop.f32.mrf.mxu0
        %v619 = vadd.f32 %v578, %v618
        %620 = vmatmul.f32.gmra.mxu0 %v215
        %v621 = vpop.f32.mrf.mxu0
        %v622 = vadd.f32 %v581, %v621
        %623 = vmatmul.f32.gmra.mxu0 %v218
        %v624 = vpop.f32.mrf.mxu0
        %v625 = vadd.f32 %v584, %v624
        %626 = vdwg.mxu0
        %627 = vmatpush.msra.mxu0 %v409
        %628 = vmatpush.msra.mxu0 %v405
        %629 = vmatpush.msra.mxu0 %v401
        %630 = vmatpush.msra.mxu0 %v397
        %631 = vmatpush.msra.mxu0 %v393
        %632 = vmatpush.msra.mxu0 %v389
        %633 = vmatpush.msra.mxu0 %v385
        %634 = vmatpush.msra.mxu0 %v381
        %635 = vmatpush.msra.mxu0 %v377
        %636 = vmatpush.msra.mxu0 %v373
        %637 = vmatpush.msra.mxu0 %v369
        %638 = vmatpush.msra.mxu0 %v365
        %639 = vmatpush.msra.mxu0 %v361
        %640 = vmatpush.msra.mxu0 %v357
        %641 = vmatpush.msra.mxu0 %v353
        %642 = vmatpush.msra.mxu0 %v349
        %643 = vmatmul.f32.gmra.mxu0 %v198
        %v644 = vpop.f32.mrf.mxu0
        %v645 = vadd.f32 %v604, %v644
        %646 = vmatmul.f32.gmra.mxu0 %v201
        %v647 = vpop.f32.mrf.mxu0
        %v648 = vadd.f32 %v607, %v647
        %649 = vmatmul.f32.gmra.mxu0 %v204
        %v650 = vpop.f32.mrf.mxu0
        %v651 = vadd.f32 %v610, %v650
        %652 = vmatmul.f32.gmra.mxu0 %v207
        %v653 = vpop.f32.mrf.mxu0
        %v654 = vadd.f32 %v613, %v653
        %655 = vmatmul.f32.gmra.mxu0 %v210
        %v656 = vpop.f32.mrf.mxu0
        %v657 = vadd.f32 %v616, %v656
        %658 = vmatmul.f32.gmra.mxu0 %v213
        %v659 = vpop.f32.mrf.mxu0
        %v660 = vadd.f32 %v619, %v659
        %661 = vmatmul.f32.gmra.mxu0 %v216
        %v662 = vpop.f32.mrf.mxu0
        %v663 = vadd.f32 %v622, %v662
        %664 = vmatmul.f32.gmra.mxu0 %v219
        %v665 = vpop.f32.mrf.mxu0
        %v666 = vadd.f32 %v625, %v665
        %667 = vdwg.mxu0
        %668 = vmatpush.msra.mxu0 %v282
        %669 = vmatpush.msra.mxu0 %v278
        %670 = vmatpush.msra.mxu0 %v274
        %671 = vmatpush.msra.mxu0 %v270
        %672 = vmatpush.msra.mxu0 %v266
        %673 = vmatpush.msra.mxu0 %v262
        %674 = vmatpush.msra.mxu0 %v258
        %675 = vmatpush.msra.mxu0 %v254
        %676 = vmatpush.msra.mxu0 %v250
        %677 = vmatpush.msra.mxu0 %v246
        %678 = vmatpush.msra.mxu0 %v242
        %679 = vmatpush.msra.mxu0 %v238
        %680 = vmatpush.msra.mxu0 %v234
        %681 = vmatpush.msra.mxu0 %v230
        %682 = vmatpush.msra.mxu0 %v226
        %683 = vmatpush.msra.mxu0 %v222
        %684 = vmatmul.f32.gmra.mxu0 %v196
        %v685 = vpop.f32.mrf.mxu0
        %v686 = vadd.f32 %v416, %v685
        %687 = vmatmul.f32.gmra.mxu0 %v199
        %v688 = vpop.f32.mrf.mxu0
        %v689 = vadd.f32 %v416, %v688
        %690 = vmatmul.f32.gmra.mxu0 %v202
        %v691 = vpop.f32.mrf.mxu0
        %v692 = vadd.f32 %v416, %v691
        %693 = vmatmul.f32.gmra.mxu0 %v205
        %v694 = vpop.f32.mrf.mxu0
        %v695 = vadd.f32 %v416, %v694
        %696 = vmatmul.f32.gmra.mxu0 %v208
        %v697 = vpop.f32.mrf.mxu0
        %v698 = vadd.f32 %v416, %v697
        %699 = vmatmul.f32.gmra.mxu0 %v211
        %v700 = vpop.f32.mrf.mxu0
        %v701 = vadd.f32 %v416, %v700
        %702 = vmatmul.f32.gmra.mxu0 %v214
        %v703 = vpop.f32.mrf.mxu0
        %v704 = vadd.f32 %v416, %v703
        %705 = vmatmul.f32.gmra.mxu0 %v217
        %v706 = vpop.f32.mrf.mxu0
        %v707 = vadd.f32 %v416, %v706
        %708 = vdwg.mxu0
        %709 = vmatpush.msra.mxu0 %v346
        %710 = vmatpush.msra.mxu0 %v342
        %711 = vmatpush.msra.mxu0 %v338
        %712 = vmatpush.msra.mxu0 %v334
        %713 = vmatpush.msra.mxu0 %v330
        %714 = vmatpush.msra.mxu0 %v326
        %715 = vmatpush.msra.mxu0 %v322
        %716 = vmatpush.msra.mxu0 %v318
        %717 = vmatpush.msra.mxu0 %v314
        %718 = vmatpush.msra.mxu0 %v310
        %719 = vmatpush.msra.mxu0 %v306
        %720 = vmatpush.msra.mxu0 %v302
        %721 = vmatpush.msra.mxu0 %v298
        %722 = vmatpush.msra.mxu0 %v294
        %723 = vmatpush.msra.mxu0 %v290
        %724 = vmatpush.msra.mxu0 %v286
        %725 = vmatmul.f32.gmra.mxu0 %v197
        %v726 = vpop.f32.mrf.mxu0
        %v727 = vadd.f32 %v686, %v726
        %728 = vmatmul.f32.gmra.mxu0 %v200
        %v729 = vpop.f32.mrf.mxu0
        %v730 = vadd.f32 %v689, %v729
        %731 = vmatmul.f32.gmra.mxu0 %v203
        %v732 = vpop.f32.mrf.mxu0
        %v733 = vadd.f32 %v692, %v732
        %734 = vmatmul.f32.gmra.mxu0 %v206
        %v735 = vpop.f32.mrf.mxu0
        %v736 = vadd.f32 %v695, %v735
        %737 = vmatmul.f32.gmra.mxu0 %v209
        %v738 = vpop.f32.mrf.mxu0
        %v739 = vadd.f32 %v698, %v738
        %740 = vmatmul.f32.gmra.mxu0 %v212
        %v741 = vpop.f32.mrf.mxu0
        %v742 = vadd.f32 %v701, %v741
        %743 = vmatmul.f32.gmra.mxu0 %v215
        %v744 = vpop.f32.mrf.mxu0
        %v745 = vadd.f32 %v704, %v744
        %746 = vmatmul.f32.gmra.mxu0 %v218
        %v747 = vpop.f32.mrf.mxu0
        %v748 = vadd.f32 %v707, %v747
        %749 = vdwg.mxu0
        %750 = vmatpush.msra.mxu0 %v410
        %751 = vmatpush.msra.mxu0 %v406
        %752 = vmatpush.msra.mxu0 %v402
        %753 = vmatpush.msra.mxu0 %v398
        %754 = vmatpush.msra.mxu0 %v394
        %755 = vmatpush.msra.mxu0 %v390
        %756 = vmatpush.msra.mxu0 %v386
        %757 = vmatpush.msra.mxu0 %v382
        %758 = vmatpush.msra.mxu0 %v378
        %759 = vmatpush.msra.mxu0 %v374
        %760 = vmatpush.msra.mxu0 %v370
        %761 = vmatpush.msra.mxu0 %v366
        %762 = vmatpush.msra.mxu0 %v362
        %763 = vmatpush.msra.mxu0 %v358
        %764 = vmatpush.msra.mxu0 %v354
        %765 = vmatpush.msra.mxu0 %v350
        %766 = vmatmul.f32.gmra.mxu0 %v198
        %v767 = vpop.f32.mrf.mxu0
        %v768 = vadd.f32 %v727, %v767
        %769 = vmatmul.f32.gmra.mxu0 %v201
        %v770 = vpop.f32.mrf.mxu0
        %v771 = vadd.f32 %v730, %v770
        %772 = vmatmul.f32.gmra.mxu0 %v204
        %v773 = vpop.f32.mrf.mxu0
        %v774 = vadd.f32 %v733, %v773
        %775 = vmatmul.f32.gmra.mxu0 %v207
        %v776 = vpop.f32.mrf.mxu0
        %v777 = vadd.f32 %v736, %v776
        %778 = vmatmul.f32.gmra.mxu0 %v210
        %v779 = vpop.f32.mrf.mxu0
        %v780 = vadd.f32 %v739, %v779
        %781 = vmatmul.f32.gmra.mxu0 %v213
        %v782 = vpop.f32.mrf.mxu0
        %v783 = vadd.f32 %v742, %v782
        %784 = vmatmul.f32.gmra.mxu0 %v216
        %v785 = vpop.f32.mrf.mxu0
        %v786 = vadd.f32 %v745, %v785
        %787 = vmatmul.f32.gmra.mxu0 %v219
        %v788 = vpop.f32.mrf.mxu0
        %v789 = vadd.f32 %v748, %v788
        %790 = vdwg.mxu0
        %791 = vmatpush.msra.mxu0 %v283
        %792 = vmatpush.msra.mxu0 %v279
        %793 = vmatpush.msra.mxu0 %v275
        %794 = vmatpush.msra.mxu0 %v271
        %795 = vmatpush.msra.mxu0 %v267
        %796 = vmatpush.msra.mxu0 %v263
        %797 = vmatpush.msra.mxu0 %v259
        %798 = vmatpush.msra.mxu0 %v255
        %799 = vmatpush.msra.mxu0 %v251
        %800 = vmatpush.msra.mxu0 %v247
        %801 = vmatpush.msra.mxu0 %v243
        %802 = vmatpush.msra.mxu0 %v239
        %803 = vmatpush.msra.mxu0 %v235
        %804 = vmatpush.msra.mxu0 %v231
        %805 = vmatpush.msra.mxu0 %v227
        %806 = vmatpush.msra.mxu0 %v223
        %807 = vmatmul.f32.gmra.mxu0 %v196
        %v808 = vpop.f32.mrf.mxu0
        %v809 = vadd.f32 %v417, %v808
        %810 = vmatmul.f32.gmra.mxu0 %v199
        %v811 = vpop.f32.mrf.mxu0
        %v812 = vadd.f32 %v417, %v811
        %813 = vmatmul.f32.gmra.mxu0 %v202
        %v814 = vpop.f32.mrf.mxu0
        %v815 = vadd.f32 %v417, %v814
        %816 = vmatmul.f32.gmra.mxu0 %v205
        %v817 = vpop.f32.mrf.mxu0
        %v818 = vadd.f32 %v417, %v817
        %819 = vmatmul.f32.gmra.mxu0 %v208
        %v820 = vpop.f32.mrf.mxu0
        %v821 = vadd.f32 %v417, %v820
        %822 = vmatmul.f32.gmra.mxu0 %v211
        %v823 = vpop.f32.mrf.mxu0
        %v824 = vadd.f32 %v417, %v823
        %825 = vmatmul.f32.gmra.mxu0 %v214
        %v826 = vpop.f32.mrf.mxu0
        %v827 = vadd.f32 %v417, %v826
        %828 = vmatmul.f32.gmra.mxu0 %v217
        %v829 = vpop.f32.mrf.mxu0
        %v830 = vadd.f32 %v417, %v829
        %831 = vdwg.mxu0
        %832 = vmatpush.msra.mxu0 %v347
        %833 = vmatpush.msra.mxu0 %v343
        %834 = vmatpush.msra.mxu0 %v339
        %835 = vmatpush.msra.mxu0 %v335
        %836 = vmatpush.msra.mxu0 %v331
        %837 = vmatpush.msra.mxu0 %v327
        %838 = vmatpush.msra.mxu0 %v323
        %839 = vmatpush.msra.mxu0 %v319
        %840 = vmatpush.msra.mxu0 %v315
        %841 = vmatpush.msra.mxu0 %v311
        %842 = vmatpush.msra.mxu0 %v307
        %843 = vmatpush.msra.mxu0 %v303
        %844 = vmatpush.msra.mxu0 %v299
        %845 = vmatpush.msra.mxu0 %v295
        %846 = vmatpush.msra.mxu0 %v291
        %847 = vmatpush.msra.mxu0 %v287
        %848 = vmatmul.f32.gmra.mxu0 %v197
        %v849 = vpop.f32.mrf.mxu0
        %v850 = vadd.f32 %v809, %v849
        %851 = vmatmul.f32.gmra.mxu0 %v200
        %v852 = vpop.f32.mrf.mxu0
        %v853 = vadd.f32 %v812, %v852
        %854 = vmatmul.f32.gmra.mxu0 %v203
        %v855 = vpop.f32.mrf.mxu0
        %v856 = vadd.f32 %v815, %v855
        %857 = vmatmul.f32.gmra.mxu0 %v206
        %v858 = vpop.f32.mrf.mxu0
        %v859 = vadd.f32 %v818, %v858
        %860 = vmatmul.f32.gmra.mxu0 %v209
        %v861 = vpop.f32.mrf.mxu0
        %v862 = vadd.f32 %v821, %v861
        %863 = vmatmul.f32.gmra.mxu0 %v212
        %v864 = vpop.f32.mrf.mxu0
        %v865 = vadd.f32 %v824, %v864
        %866 = vmatmul.f32.gmra.mxu0 %v215
        %v867 = vpop.f32.mrf.mxu0
        %v868 = vadd.f32 %v827, %v867
        %869 = vmatmul.f32.gmra.mxu0 %v218
        %v870 = vpop.f32.mrf.mxu0
        %v871 = vadd.f32 %v830, %v870
        %872 = vdwg.mxu0
        %873 = vmatpush.msra.mxu0 %v411
        %874 = vmatpush.msra.mxu0 %v407
        %875 = vmatpush.msra.mxu0 %v403
        %876 = vmatpush.msra.mxu0 %v399
        %877 = vmatpush.msra.mxu0 %v395
        %878 = vmatpush.msra.mxu0 %v391
        %879 = vmatpush.msra.mxu0 %v387
        %880 = vmatpush.msra.mxu0 %v383
        %881 = vmatpush.msra.mxu0 %v379
        %882 = vmatpush.msra.mxu0 %v375
        %883 = vmatpush.msra.mxu0 %v371
        %884 = vmatpush.msra.mxu0 %v367
        %885 = vmatpush.msra.mxu0 %v363
        %886 = vmatpush.msra.mxu0 %v359
        %887 = vmatpush.msra.mxu0 %v355
        %888 = vmatpush.msra.mxu0 %v351
        %889 = vmatmul.f32.gmra.mxu0 %v198
        %v890 = vpop.f32.mrf.mxu0
        %v891 = vadd.f32 %v850, %v890
        %892 = vmatmul.f32.gmra.mxu0 %v201
        %v893 = vpop.f32.mrf.mxu0
        %v894 = vadd.f32 %v853, %v893
        %895 = vmatmul.f32.gmra.mxu0 %v204
        %v896 = vpop.f32.mrf.mxu0
        %v897 = vadd.f32 %v856, %v896
        %898 = vmatmul.f32.gmra.mxu0 %v207
        %v899 = vpop.f32.mrf.mxu0
        %v900 = vadd.f32 %v859, %v899
        %901 = vmatmul.f32.gmra.mxu0 %v210
        %v902 = vpop.f32.mrf.mxu0
        %v903 = vadd.f32 %v862, %v902
        %904 = vmatmul.f32.gmra.mxu0 %v213
        %v905 = vpop.f32.mrf.mxu0
        %v906 = vadd.f32 %v865, %v905
        %907 = vmatmul.f32.gmra.mxu0 %v216
        %v908 = vpop.f32.mrf.mxu0
        %v909 = vadd.f32 %v868, %v908
        %910 = vmatmul.f32.gmra.mxu0 %v219
        %v911 = vpop.f32.mrf.mxu0
        %v912 = vadd.f32 %v871, %v911
        %913 = vdwg.mxu0
        %v914 = vld [vmem:[%s3] sm:$0xff]
        %v915 = vld [vmem:[%s3 + $0x8] sm:$0xff]
        %v916 = vld [vmem:[%s3 + $0x10] sm:$0xff]
        %v917 = vld [vmem:[%s3 + $0x18] sm:$0xff]
        %v918 = vld [vmem:[%s3 + $0x20] sm:$0xff]
        %v919 = vld [vmem:[%s3 + $0x28] sm:$0xff]
        %v920 = vld [vmem:[%s3 + $0x30] sm:$0xff]
        %v921 = vld [vmem:[%s3 + $0x38] sm:$0xff]
        %v922 = vld [vmem:[%s3 + $0x40] sm:$0xff]
        %v923 = vld [vmem:[%s3 + $0x48] sm:$0xff]
        %v924 = vld [vmem:[%s3 + $0x50] sm:$0xff]
        %v925 = vld [vmem:[%s3 + $0x58] sm:$0xff]
        %v926 = vld [vmem:[%s3 + $0x60] sm:$0xff]
        %v927 = vld [vmem:[%s3 + $0x68] sm:$0xff]
        %v928 = vld [vmem:[%s3 + $0x70] sm:$0xff]
        %v929 = vld [vmem:[%s3 + $0x78] sm:$0xff]
        %v930 = vld [vmem:[%s3 + $0x80] sm:$0xff]
        %v931 = vld [vmem:[%s3 + $0x88] sm:$0xff]
        %v932 = vld [vmem:[%s3 + $0x90] sm:$0xff]
        %v933 = vld [vmem:[%s3 + $0x98] sm:$0xff]
        %v934 = vld [vmem:[%s3 + $0xa0] sm:$0xff]
        %v935 = vld [vmem:[%s3 + $0xa8] sm:$0xff]
        %v936 = vld [vmem:[%s3 + $0xb0] sm:$0xff]
        %v937 = vld [vmem:[%s3 + $0xb8] sm:$0xff]
        %v938 = vld [vmem:[%s3 + $0xc0] sm:$0xff]
        %v939 = vld [vmem:[%s3 + $0xc8] sm:$0xff]
        %v940 = vld [vmem:[%s3 + $0xd0] sm:$0xff]
        %v941 = vld [vmem:[%s3 + $0xd8] sm:$0xff]
        %v942 = vld [vmem:[%s3 + $0xe0] sm:$0xff]
        %v943 = vld [vmem:[%s3 + $0xe8] sm:$0xff]
        %v944 = vld [vmem:[%s3 + $0xf0] sm:$0xff]
        %v945 = vld [vmem:[%s3 + $0xf8] sm:$0xff]
        %vm946 = vcmask 523264
        %v948 = vsel %vm946, %v914, 0
        %v951 = vsel %vm946, %v915, 0
        %v954 = vsel %vm946, %v916, 0
        %v957 = vsel %vm946, %v917, 0
        %v960 = vsel %vm946, %v918, 0
        %v963 = vsel %vm946, %v919, 0
        %v966 = vsel %vm946, %v920, 0
        %v969 = vsel %vm946, %v921, 0
        %v972 = vsel %vm946, %v922, 0
        %v975 = vsel %vm946, %v923, 0
        %v978 = vsel %vm946, %v924, 0
        %v981 = vsel %vm946, %v925, 0
        %v984 = vsel %vm946, %v926, 0
        %v987 = vsel %vm946, %v927, 0
        %v990 = vsel %vm946, %v928, 0
        %v993 = vsel %vm946, %v929, 0
        %v996 = vsel %vm946, %v930, 0
        %v999 = vsel %vm946, %v931, 0
        %v1002 = vsel %vm946, %v932, 0
        %v1005 = vsel %vm946, %v933, 0
        %v1008 = vsel %vm946, %v934, 0
        %v1011 = vsel %vm946, %v935, 0
        %v1014 = vsel %vm946, %v936, 0
        %v1017 = vsel %vm946, %v937, 0
        %v1020 = vsel %vm946, %v938, 0
        %v1023 = vsel %vm946, %v939, 0
        %v1026 = vsel %vm946, %v940, 0
        %v1029 = vsel %vm946, %v941, 0
        %v1032 = vsel %vm946, %v942, 0
        %v1035 = vsel %vm946, %v943, 0
        %v1038 = vsel %vm946, %v944, 0
        %v1041 = vsel %vm946, %v945, 0
        %1043 = vmatpush.msra.mxu0 0.0
        %1044 = vmatpush.msra.mxu0 0.0
        %1045 = vmatpush.msra.mxu0 0.0
        %1046 = vmatpush.msra.mxu0 0.0
        %1047 = vmatpush.msra.mxu0 0.0
        %1048 = vmatpush.msra.mxu0 0.0
        %1049 = vmatpush.msra.mxu0 0.0
        %1050 = vmatpush.msra.mxu0 0.0
        %1051 = vmatpush.msra.mxu0 %v543
        %1052 = vmatpush.msra.mxu0 %v540
        %1053 = vmatpush.msra.mxu0 %v537
        %1054 = vmatpush.msra.mxu0 %v534
        %1055 = vmatpush.msra.mxu0 %v531
        %1056 = vmatpush.msra.mxu0 %v528
        %1057 = vmatpush.msra.mxu0 %v525
        %1058 = vmatpush.msra.mxu0 %v522
        %1059 = vmatmul.f32.gmra.mxu0 %v948
        %v1060 = vpop.f32.mrf.mxu0
        %v1061 = vadd.f32 0.0, %v1060
        %1062 = vmatmul.f32.gmra.mxu0 %v951
        %v1063 = vpop.f32.mrf.mxu0
        %v1064 = vadd.f32 0.0, %v1063
        %1065 = vmatmul.f32.gmra.mxu0 %v954
        %v1066 = vpop.f32.mrf.mxu0
        %v1067 = vadd.f32 0.0, %v1066
        %1068 = vmatmul.f32.gmra.mxu0 %v957
        %v1069 = vpop.f32.mrf.mxu0
        %v1070 = vadd.f32 0.0, %v1069
        %1071 = vmatmul.f32.gmra.mxu0 %v960
        %v1072 = vpop.f32.mrf.mxu0
        %v1073 = vadd.f32 0.0, %v1072
        %1074 = vmatmul.f32.gmra.mxu0 %v963
        %v1075 = vpop.f32.mrf.mxu0
        %v1076 = vadd.f32 0.0, %v1075
        %1077 = vmatmul.f32.gmra.mxu0 %v966
        %v1078 = vpop.f32.mrf.mxu0
        %v1079 = vadd.f32 0.0, %v1078
        %1080 = vmatmul.f32.gmra.mxu0 %v969
        %v1081 = vpop.f32.mrf.mxu0
        %v1082 = vadd.f32 0.0, %v1081
        %1083 = vmatmul.f32.gmra.mxu0 %v972
        %v1084 = vpop.f32.mrf.mxu0
        %v1085 = vadd.f32 0.0, %v1084
        %1086 = vmatmul.f32.gmra.mxu0 %v975
        %v1087 = vpop.f32.mrf.mxu0
        %v1088 = vadd.f32 0.0, %v1087
        %1089 = vmatmul.f32.gmra.mxu0 %v978
        %v1090 = vpop.f32.mrf.mxu0
        %v1091 = vadd.f32 0.0, %v1090
        %1092 = vmatmul.f32.gmra.mxu0 %v981
        %v1093 = vpop.f32.mrf.mxu0
        %v1094 = vadd.f32 0.0, %v1093
        %1095 = vmatmul.f32.gmra.mxu0 %v984
        %v1096 = vpop.f32.mrf.mxu0
        %v1097 = vadd.f32 0.0, %v1096
        %1098 = vmatmul.f32.gmra.mxu0 %v987
        %v1099 = vpop.f32.mrf.mxu0
        %v1100 = vadd.f32 0.0, %v1099
        %1101 = vmatmul.f32.gmra.mxu0 %v990
        %v1102 = vpop.f32.mrf.mxu0
        %v1103 = vadd.f32 0.0, %v1102
        %1104 = vmatmul.f32.gmra.mxu0 %v993
        %v1105 = vpop.f32.mrf.mxu0
        %v1106 = vadd.f32 0.0, %v1105
        %1107 = vmatmul.f32.gmra.mxu0 %v996
        %v1108 = vpop.f32.mrf.mxu0
        %v1109 = vadd.f32 0.0, %v1108
        %1110 = vmatmul.f32.gmra.mxu0 %v999
        %v1111 = vpop.f32.mrf.mxu0
        %v1112 = vadd.f32 0.0, %v1111
        %1113 = vmatmul.f32.gmra.mxu0 %v1002
        %v1114 = vpop.f32.mrf.mxu0
        %v1115 = vadd.f32 0.0, %v1114
        %1116 = vmatmul.f32.gmra.mxu0 %v1005
        %v1117 = vpop.f32.mrf.mxu0
        %v1118 = vadd.f32 0.0, %v1117
        %1119 = vmatmul.f32.gmra.mxu0 %v1008
        %v1120 = vpop.f32.mrf.mxu0
        %v1121 = vadd.f32 0.0, %v1120
        %1122 = vmatmul.f32.gmra.mxu0 %v1011
        %v1123 = vpop.f32.mrf.mxu0
        %v1124 = vadd.f32 0.0, %v1123
        %1125 = vmatmul.f32.gmra.mxu0 %v1014
        %v1126 = vpop.f32.mrf.mxu0
        %v1127 = vadd.f32 0.0, %v1126
        %1128 = vmatmul.f32.gmra.mxu0 %v1017
        %v1129 = vpop.f32.mrf.mxu0
        %v1130 = vadd.f32 0.0, %v1129
        %1131 = vmatmul.f32.gmra.mxu0 %v1020
        %v1132 = vpop.f32.mrf.mxu0
        %v1133 = vadd.f32 0.0, %v1132
        %1134 = vmatmul.f32.gmra.mxu0 %v1023
        %v1135 = vpop.f32.mrf.mxu0
        %v1136 = vadd.f32 0.0, %v1135
        %1137 = vmatmul.f32.gmra.mxu0 %v1026
        %v1138 = vpop.f32.mrf.mxu0
        %v1139 = vadd.f32 0.0, %v1138
        %1140 = vmatmul.f32.gmra.mxu0 %v1029
        %v1141 = vpop.f32.mrf.mxu0
        %v1142 = vadd.f32 0.0, %v1141
        %1143 = vmatmul.f32.gmra.mxu0 %v1032
        %v1144 = vpop.f32.mrf.mxu0
        %v1145 = vadd.f32 0.0, %v1144
        %1146 = vmatmul.f32.gmra.mxu0 %v1035
        %v1147 = vpop.f32.mrf.mxu0
        %v1148 = vadd.f32 0.0, %v1147
        %1149 = vmatmul.f32.gmra.mxu0 %v1038
        %v1150 = vpop.f32.mrf.mxu0
        %v1151 = vadd.f32 0.0, %v1150
        %1152 = vmatmul.f32.gmra.mxu0 %v1041
        %v1153 = vpop.f32.mrf.mxu0
        %v1154 = vadd.f32 0.0, %v1153
        %1155 = vdwg.mxu0
        %1156 = vmatpush.msra.mxu0 0.0
        %1157 = vmatpush.msra.mxu0 0.0
        %1158 = vmatpush.msra.mxu0 0.0
        %1159 = vmatpush.msra.mxu0 0.0
        %1160 = vmatpush.msra.mxu0 0.0
        %1161 = vmatpush.msra.mxu0 0.0
        %1162 = vmatpush.msra.mxu0 0.0
        %1163 = vmatpush.msra.mxu0 0.0
        %1164 = vmatpush.msra.mxu0 %v666
        %1165 = vmatpush.msra.mxu0 %v663
        %1166 = vmatpush.msra.mxu0 %v660
        %1167 = vmatpush.msra.mxu0 %v657
        %1168 = vmatpush.msra.mxu0 %v654
        %1169 = vmatpush.msra.mxu0 %v651
        %1170 = vmatpush.msra.mxu0 %v648
        %1171 = vmatpush.msra.mxu0 %v645
        %1172 = vmatmul.f32.gmra.mxu0 %v948
        %v1173 = vpop.f32.mrf.mxu0
        %v1174 = vadd.f32 0.0, %v1173
        %1175 = vmatmul.f32.gmra.mxu0 %v951
        %v1176 = vpop.f32.mrf.mxu0
        %v1177 = vadd.f32 0.0, %v1176
        %1178 = vmatmul.f32.gmra.mxu0 %v954
        %v1179 = vpop.f32.mrf.mxu0
        %v1180 = vadd.f32 0.0, %v1179
        %1181 = vmatmul.f32.gmra.mxu0 %v957
        %v1182 = vpop.f32.mrf.mxu0
        %v1183 = vadd.f32 0.0, %v1182
        %1184 = vmatmul.f32.gmra.mxu0 %v960
        %v1185 = vpop.f32.mrf.mxu0
        %v1186 = vadd.f32 0.0, %v1185
        %1187 = vmatmul.f32.gmra.mxu0 %v963
        %v1188 = vpop.f32.mrf.mxu0
        %v1189 = vadd.f32 0.0, %v1188
        %1190 = vmatmul.f32.gmra.mxu0 %v966
        %v1191 = vpop.f32.mrf.mxu0
        %v1192 = vadd.f32 0.0, %v1191
        %1193 = vmatmul.f32.gmra.mxu0 %v969
        %v1194 = vpop.f32.mrf.mxu0
        %v1195 = vadd.f32 0.0, %v1194
        %1196 = vmatmul.f32.gmra.mxu0 %v972
        %v1197 = vpop.f32.mrf.mxu0
        %v1198 = vadd.f32 0.0, %v1197
        %1199 = vmatmul.f32.gmra.mxu0 %v975
        %v1200 = vpop.f32.mrf.mxu0
        %v1201 = vadd.f32 0.0, %v1200
        %1202 = vmatmul.f32.gmra.mxu0 %v978
        %v1203 = vpop.f32.mrf.mxu0
        %v1204 = vadd.f32 0.0, %v1203
        %1205 = vmatmul.f32.gmra.mxu0 %v981
        %v1206 = vpop.f32.mrf.mxu0
        %v1207 = vadd.f32 0.0, %v1206
        %1208 = vmatmul.f32.gmra.mxu0 %v984
        %v1209 = vpop.f32.mrf.mxu0
        %v1210 = vadd.f32 0.0, %v1209
        %1211 = vmatmul.f32.gmra.mxu0 %v987
        %v1212 = vpop.f32.mrf.mxu0
        %v1213 = vadd.f32 0.0, %v1212
        %1214 = vmatmul.f32.gmra.mxu0 %v990
        %v1215 = vpop.f32.mrf.mxu0
        %v1216 = vadd.f32 0.0, %v1215
        %1217 = vmatmul.f32.gmra.mxu0 %v993
        %v1218 = vpop.f32.mrf.mxu0
        %v1219 = vadd.f32 0.0, %v1218
        %1220 = vmatmul.f32.gmra.mxu0 %v996
        %v1221 = vpop.f32.mrf.mxu0
        %v1222 = vadd.f32 0.0, %v1221
        %1223 = vmatmul.f32.gmra.mxu0 %v999
        %v1224 = vpop.f32.mrf.mxu0
        %v1225 = vadd.f32 0.0, %v1224
        %1226 = vmatmul.f32.gmra.mxu0 %v1002
        %v1227 = vpop.f32.mrf.mxu0
        %v1228 = vadd.f32 0.0, %v1227
        %1229 = vmatmul.f32.gmra.mxu0 %v1005
        %v1230 = vpop.f32.mrf.mxu0
        %v1231 = vadd.f32 0.0, %v1230
        %1232 = vmatmul.f32.gmra.mxu0 %v1008
        %v1233 = vpop.f32.mrf.mxu0
        %v1234 = vadd.f32 0.0, %v1233
        %1235 = vmatmul.f32.gmra.mxu0 %v1011
        %v1236 = vpop.f32.mrf.mxu0
        %v1237 = vadd.f32 0.0, %v1236
        %1238 = vmatmul.f32.gmra.mxu0 %v1014
        %v1239 = vpop.f32.mrf.mxu0
        %v1240 = vadd.f32 0.0, %v1239
        %1241 = vmatmul.f32.gmra.mxu0 %v1017
        %v1242 = vpop.f32.mrf.mxu0
        %v1243 = vadd.f32 0.0, %v1242
        %1244 = vmatmul.f32.gmra.mxu0 %v1020
        %v1245 = vpop.f32.mrf.mxu0
        %v1246 = vadd.f32 0.0, %v1245
        %1247 = vmatmul.f32.gmra.mxu0 %v1023
        %v1248 = vpop.f32.mrf.mxu0
        %v1249 = vadd.f32 0.0, %v1248
        %1250 = vmatmul.f32.gmra.mxu0 %v1026
        %v1251 = vpop.f32.mrf.mxu0
        %v1252 = vadd.f32 0.0, %v1251
        %1253 = vmatmul.f32.gmra.mxu0 %v1029
        %v1254 = vpop.f32.mrf.mxu0
        %v1255 = vadd.f32 0.0, %v1254
        %1256 = vmatmul.f32.gmra.mxu0 %v1032
        %v1257 = vpop.f32.mrf.mxu0
        %v1258 = vadd.f32 0.0, %v1257
        %1259 = vmatmul.f32.gmra.mxu0 %v1035
        %v1260 = vpop.f32.mrf.mxu0
        %v1261 = vadd.f32 0.0, %v1260
        %1262 = vmatmul.f32.gmra.mxu0 %v1038
        %v1263 = vpop.f32.mrf.mxu0
        %v1264 = vadd.f32 0.0, %v1263
        %1265 = vmatmul.f32.gmra.mxu0 %v1041
        %v1266 = vpop.f32.mrf.mxu0
        %v1267 = vadd.f32 0.0, %v1266
        %1268 = vdwg.mxu0
        %1269 = vmatpush.msra.mxu0 0.0
        %1270 = vmatpush.msra.mxu0 0.0
        %1271 = vmatpush.msra.mxu0 0.0
        %1272 = vmatpush.msra.mxu0 0.0
        %1273 = vmatpush.msra.mxu0 0.0
        %1274 = vmatpush.msra.mxu0 0.0
        %1275 = vmatpush.msra.mxu0 0.0
        %1276 = vmatpush.msra.mxu0 0.0
        %1277 = vmatpush.msra.mxu0 %v789
        %1278 = vmatpush.msra.mxu0 %v786
        %1279 = vmatpush.msra.mxu0 %v783
        %1280 = vmatpush.msra.mxu0 %v780
        %1281 = vmatpush.msra.mxu0 %v777
        %1282 = vmatpush.msra.mxu0 %v774
        %1283 = vmatpush.msra.mxu0 %v771
        %1284 = vmatpush.msra.mxu0 %v768
        %1285 = vmatmul.f32.gmra.mxu0 %v948
        %v1286 = vpop.f32.mrf.mxu0
        %v1287 = vadd.f32 0.0, %v1286
        %1288 = vmatmul.f32.gmra.mxu0 %v951
        %v1289 = vpop.f32.mrf.mxu0
        %v1290 = vadd.f32 0.0, %v1289
        %1291 = vmatmul.f32.gmra.mxu0 %v954
        %v1292 = vpop.f32.mrf.mxu0
        %v1293 = vadd.f32 0.0, %v1292
        %1294 = vmatmul.f32.gmra.mxu0 %v957
        %v1295 = vpop.f32.mrf.mxu0
        %v1296 = vadd.f32 0.0, %v1295
        %1297 = vmatmul.f32.gmra.mxu0 %v960
        %v1298 = vpop.f32.mrf.mxu0
        %v1299 = vadd.f32 0.0, %v1298
        %1300 = vmatmul.f32.gmra.mxu0 %v963
        %v1301 = vpop.f32.mrf.mxu0
        %v1302 = vadd.f32 0.0, %v1301
        %1303 = vmatmul.f32.gmra.mxu0 %v966
        %v1304 = vpop.f32.mrf.mxu0
        %v1305 = vadd.f32 0.0, %v1304
        %1306 = vmatmul.f32.gmra.mxu0 %v969
        %v1307 = vpop.f32.mrf.mxu0
        %v1308 = vadd.f32 0.0, %v1307
        %1309 = vmatmul.f32.gmra.mxu0 %v972
        %v1310 = vpop.f32.mrf.mxu0
        %v1311 = vadd.f32 0.0, %v1310
        %1312 = vmatmul.f32.gmra.mxu0 %v975
        %v1313 = vpop.f32.mrf.mxu0
        %v1314 = vadd.f32 0.0, %v1313
        %1315 = vmatmul.f32.gmra.mxu0 %v978
        %v1316 = vpop.f32.mrf.mxu0
        %v1317 = vadd.f32 0.0, %v1316
        %1318 = vmatmul.f32.gmra.mxu0 %v981
        %v1319 = vpop.f32.mrf.mxu0
        %v1320 = vadd.f32 0.0, %v1319
        %1321 = vmatmul.f32.gmra.mxu0 %v984
        %v1322 = vpop.f32.mrf.mxu0
        %v1323 = vadd.f32 0.0, %v1322
        %1324 = vmatmul.f32.gmra.mxu0 %v987
        %v1325 = vpop.f32.mrf.mxu0
        %v1326 = vadd.f32 0.0, %v1325
        %1327 = vmatmul.f32.gmra.mxu0 %v990
        %v1328 = vpop.f32.mrf.mxu0
        %v1329 = vadd.f32 0.0, %v1328
        %1330 = vmatmul.f32.gmra.mxu0 %v993
        %v1331 = vpop.f32.mrf.mxu0
        %v1332 = vadd.f32 0.0, %v1331
        %1333 = vmatmul.f32.gmra.mxu0 %v996
        %v1334 = vpop.f32.mrf.mxu0
        %v1335 = vadd.f32 0.0, %v1334
        %1336 = vmatmul.f32.gmra.mxu0 %v999
        %v1337 = vpop.f32.mrf.mxu0
        %v1338 = vadd.f32 0.0, %v1337
        %1339 = vmatmul.f32.gmra.mxu0 %v1002
        %v1340 = vpop.f32.mrf.mxu0
        %v1341 = vadd.f32 0.0, %v1340
        %1342 = vmatmul.f32.gmra.mxu0 %v1005
        %v1343 = vpop.f32.mrf.mxu0
        %v1344 = vadd.f32 0.0, %v1343
        %1345 = vmatmul.f32.gmra.mxu0 %v1008
        %v1346 = vpop.f32.mrf.mxu0
        %v1347 = vadd.f32 0.0, %v1346
        %1348 = vmatmul.f32.gmra.mxu0 %v1011
        %v1349 = vpop.f32.mrf.mxu0
        %v1350 = vadd.f32 0.0, %v1349
        %1351 = vmatmul.f32.gmra.mxu0 %v1014
        %v1352 = vpop.f32.mrf.mxu0
        %v1353 = vadd.f32 0.0, %v1352
        %1354 = vmatmul.f32.gmra.mxu0 %v1017
        %v1355 = vpop.f32.mrf.mxu0
        %v1356 = vadd.f32 0.0, %v1355
        %1357 = vmatmul.f32.gmra.mxu0 %v1020
        %v1358 = vpop.f32.mrf.mxu0
        %v1359 = vadd.f32 0.0, %v1358
        %1360 = vmatmul.f32.gmra.mxu0 %v1023
        %v1361 = vpop.f32.mrf.mxu0
        %v1362 = vadd.f32 0.0, %v1361
        %1363 = vmatmul.f32.gmra.mxu0 %v1026
        %v1364 = vpop.f32.mrf.mxu0
        %v1365 = vadd.f32 0.0, %v1364
        %1366 = vmatmul.f32.gmra.mxu0 %v1029
        %v1367 = vpop.f32.mrf.mxu0
        %v1368 = vadd.f32 0.0, %v1367
        %1369 = vmatmul.f32.gmra.mxu0 %v1032
        %v1370 = vpop.f32.mrf.mxu0
        %v1371 = vadd.f32 0.0, %v1370
        %1372 = vmatmul.f32.gmra.mxu0 %v1035
        %v1373 = vpop.f32.mrf.mxu0
        %v1374 = vadd.f32 0.0, %v1373
        %1375 = vmatmul.f32.gmra.mxu0 %v1038
        %v1376 = vpop.f32.mrf.mxu0
        %v1377 = vadd.f32 0.0, %v1376
        %1378 = vmatmul.f32.gmra.mxu0 %v1041
        %v1379 = vpop.f32.mrf.mxu0
        %v1380 = vadd.f32 0.0, %v1379
        %1381 = vdwg.mxu0
        %1382 = vmatpush.msra.mxu0 0.0
        %1383 = vmatpush.msra.mxu0 0.0
        %1384 = vmatpush.msra.mxu0 0.0
        %1385 = vmatpush.msra.mxu0 0.0
        %1386 = vmatpush.msra.mxu0 0.0
        %1387 = vmatpush.msra.mxu0 0.0
        %1388 = vmatpush.msra.mxu0 0.0
        %1389 = vmatpush.msra.mxu0 0.0
        %1390 = vmatpush.msra.mxu0 %v912
        %1391 = vmatpush.msra.mxu0 %v909
        %1392 = vmatpush.msra.mxu0 %v906
        %1393 = vmatpush.msra.mxu0 %v903
        %1394 = vmatpush.msra.mxu0 %v900
        %1395 = vmatpush.msra.mxu0 %v897
        %1396 = vmatpush.msra.mxu0 %v894
        %1397 = vmatpush.msra.mxu0 %v891
        %1398 = vmatmul.f32.gmra.mxu0 %v948
        %v1399 = vpop.f32.mrf.mxu0
        %v1400 = vadd.f32 0.0, %v1399
        %1401 = vmatmul.f32.gmra.mxu0 %v951
        %v1402 = vpop.f32.mrf.mxu0
        %v1403 = vadd.f32 0.0, %v1402
        %1404 = vmatmul.f32.gmra.mxu0 %v954
        %v1405 = vpop.f32.mrf.mxu0
        %v1406 = vadd.f32 0.0, %v1405
        %1407 = vmatmul.f32.gmra.mxu0 %v957
        %v1408 = vpop.f32.mrf.mxu0
        %v1409 = vadd.f32 0.0, %v1408
        %1410 = vmatmul.f32.gmra.mxu0 %v960
        %v1411 = vpop.f32.mrf.mxu0
        %v1412 = vadd.f32 0.0, %v1411
        %1413 = vmatmul.f32.gmra.mxu0 %v963
        %v1414 = vpop.f32.mrf.mxu0
        %v1415 = vadd.f32 0.0, %v1414
        %1416 = vmatmul.f32.gmra.mxu0 %v966
        %v1417 = vpop.f32.mrf.mxu0
        %v1418 = vadd.f32 0.0, %v1417
        %1419 = vmatmul.f32.gmra.mxu0 %v969
        %v1420 = vpop.f32.mrf.mxu0
        %v1421 = vadd.f32 0.0, %v1420
        %1422 = vmatmul.f32.gmra.mxu0 %v972
        %v1423 = vpop.f32.mrf.mxu0
        %v1424 = vadd.f32 0.0, %v1423
        %1425 = vmatmul.f32.gmra.mxu0 %v975
        %v1426 = vpop.f32.mrf.mxu0
        %v1427 = vadd.f32 0.0, %v1426
        %1428 = vmatmul.f32.gmra.mxu0 %v978
        %v1429 = vpop.f32.mrf.mxu0
        %v1430 = vadd.f32 0.0, %v1429
        %1431 = vmatmul.f32.gmra.mxu0 %v981
        %v1432 = vpop.f32.mrf.mxu0
        %v1433 = vadd.f32 0.0, %v1432
        %1434 = vmatmul.f32.gmra.mxu0 %v984
        %v1435 = vpop.f32.mrf.mxu0
        %v1436 = vadd.f32 0.0, %v1435
        %1437 = vmatmul.f32.gmra.mxu0 %v987
        %v1438 = vpop.f32.mrf.mxu0
        %v1439 = vadd.f32 0.0, %v1438
        %1440 = vmatmul.f32.gmra.mxu0 %v990
        %v1441 = vpop.f32.mrf.mxu0
        %v1442 = vadd.f32 0.0, %v1441
        %1443 = vmatmul.f32.gmra.mxu0 %v993
        %v1444 = vpop.f32.mrf.mxu0
        %v1445 = vadd.f32 0.0, %v1444
        %1446 = vmatmul.f32.gmra.mxu0 %v996
        %v1447 = vpop.f32.mrf.mxu0
        %v1448 = vadd.f32 0.0, %v1447
        %1449 = vmatmul.f32.gmra.mxu0 %v999
        %v1450 = vpop.f32.mrf.mxu0
        %v1451 = vadd.f32 0.0, %v1450
        %1452 = vmatmul.f32.gmra.mxu0 %v1002
        %v1453 = vpop.f32.mrf.mxu0
        %v1454 = vadd.f32 0.0, %v1453
        %1455 = vmatmul.f32.gmra.mxu0 %v1005
        %v1456 = vpop.f32.mrf.mxu0
        %v1457 = vadd.f32 0.0, %v1456
        %1458 = vmatmul.f32.gmra.mxu0 %v1008
        %v1459 = vpop.f32.mrf.mxu0
        %v1460 = vadd.f32 0.0, %v1459
        %1461 = vmatmul.f32.gmra.mxu0 %v1011
        %v1462 = vpop.f32.mrf.mxu0
        %v1463 = vadd.f32 0.0, %v1462
        %1464 = vmatmul.f32.gmra.mxu0 %v1014
        %v1465 = vpop.f32.mrf.mxu0
        %v1466 = vadd.f32 0.0, %v1465
        %1467 = vmatmul.f32.gmra.mxu0 %v1017
        %v1468 = vpop.f32.mrf.mxu0
        %v1469 = vadd.f32 0.0, %v1468
        %1470 = vmatmul.f32.gmra.mxu0 %v1020
        %v1471 = vpop.f32.mrf.mxu0
        %v1472 = vadd.f32 0.0, %v1471
        %1473 = vmatmul.f32.gmra.mxu0 %v1023
        %v1474 = vpop.f32.mrf.mxu0
        %v1475 = vadd.f32 0.0, %v1474
        %1476 = vmatmul.f32.gmra.mxu0 %v1026
        %v1477 = vpop.f32.mrf.mxu0
        %v1478 = vadd.f32 0.0, %v1477
        %1479 = vmatmul.f32.gmra.mxu0 %v1029
        %v1480 = vpop.f32.mrf.mxu0
        %v1481 = vadd.f32 0.0, %v1480
        %1482 = vmatmul.f32.gmra.mxu0 %v1032
        %v1483 = vpop.f32.mrf.mxu0
        %v1484 = vadd.f32 0.0, %v1483
        %1485 = vmatmul.f32.gmra.mxu0 %v1035
        %v1486 = vpop.f32.mrf.mxu0
        %v1487 = vadd.f32 0.0, %v1486
        %1488 = vmatmul.f32.gmra.mxu0 %v1038
        %v1489 = vpop.f32.mrf.mxu0
        %v1490 = vadd.f32 0.0, %v1489
        %1491 = vmatmul.f32.gmra.mxu0 %v1041
        %v1492 = vpop.f32.mrf.mxu0
        %v1493 = vadd.f32 0.0, %v1492
        %1494 = vdwg.mxu0
        %v1495 = vadd.f32 %v1061, 3.0
        %v1496 = vadd.f32 %v1174, 3.0
        %v1497 = vadd.f32 %v1287, 3.0
        %v1498 = vadd.f32 %v1400, 3.0
        %v1499 = vadd.f32 %v1064, 3.0
        %v1500 = vadd.f32 %v1177, 3.0
        %v1501 = vadd.f32 %v1290, 3.0
        %v1502 = vadd.f32 %v1403, 3.0
        %v1503 = vadd.f32 %v1067, 3.0
        %v1504 = vadd.f32 %v1180, 3.0
        %v1505 = vadd.f32 %v1293, 3.0
        %v1506 = vadd.f32 %v1406, 3.0
        %v1507 = vadd.f32 %v1070, 3.0
        %v1508 = vadd.f32 %v1183, 3.0
        %v1509 = vadd.f32 %v1296, 3.0
        %v1510 = vadd.f32 %v1409, 3.0
        %v1511 = vadd.f32 %v1073, 3.0
        %v1512 = vadd.f32 %v1186, 3.0
        %v1513 = vadd.f32 %v1299, 3.0
        %v1514 = vadd.f32 %v1412, 3.0
        %v1515 = vadd.f32 %v1076, 3.0
        %v1516 = vadd.f32 %v1189, 3.0
        %v1517 = vadd.f32 %v1302, 3.0
        %v1518 = vadd.f32 %v1415, 3.0
        %v1519 = vadd.f32 %v1079, 3.0
        %v1520 = vadd.f32 %v1192, 3.0
        %v1521 = vadd.f32 %v1305, 3.0
        %v1522 = vadd.f32 %v1418, 3.0
        %v1523 = vadd.f32 %v1082, 3.0
        %v1524 = vadd.f32 %v1195, 3.0
        %v1525 = vadd.f32 %v1308, 3.0
        %v1526 = vadd.f32 %v1421, 3.0
        %v1527 = vadd.f32 %v1085, 3.0
        %v1528 = vadd.f32 %v1198, 3.0
        %v1529 = vadd.f32 %v1311, 3.0
        %v1530 = vadd.f32 %v1424, 3.0
        %v1531 = vadd.f32 %v1088, 3.0
        %v1532 = vadd.f32 %v1201, 3.0
        %v1533 = vadd.f32 %v1314, 3.0
        %v1534 = vadd.f32 %v1427, 3.0
        %v1535 = vadd.f32 %v1091, 3.0
        %v1536 = vadd.f32 %v1204, 3.0
        %v1537 = vadd.f32 %v1317, 3.0
        %v1538 = vadd.f32 %v1430, 3.0
        %v1539 = vadd.f32 %v1094, 3.0
        %v1540 = vadd.f32 %v1207, 3.0
        %v1541 = vadd.f32 %v1320, 3.0
        %v1542 = vadd.f32 %v1433, 3.0
        %v1543 = vadd.f32 %v1097, 3.0
        %v1544 = vadd.f32 %v1210, 3.0
        %v1545 = vadd.f32 %v1323, 3.0
        %v1546 = vadd.f32 %v1436, 3.0
        %v1547 = vadd.f32 %v1100, 3.0
        %v1548 = vadd.f32 %v1213, 3.0
        %v1549 = vadd.f32 %v1326, 3.0
        %v1550 = vadd.f32 %v1439, 3.0
        %v1551 = vadd.f32 %v1103, 3.0
        %v1552 = vadd.f32 %v1216, 3.0
        %v1553 = vadd.f32 %v1329, 3.0
        %v1554 = vadd.f32 %v1442, 3.0
        %v1555 = vadd.f32 %v1106, 3.0
        %v1556 = vadd.f32 %v1219, 3.0
        %v1557 = vadd.f32 %v1332, 3.0
        %v1558 = vadd.f32 %v1445, 3.0
        %v1559 = vadd.f32 %v1109, 3.0
        %v1560 = vadd.f32 %v1222, 3.0
        %v1561 = vadd.f32 %v1335, 3.0
        %v1562 = vadd.f32 %v1448, 3.0
        %v1563 = vadd.f32 %v1112, 3.0
        %v1564 = vadd.f32 %v1225, 3.0
        %v1565 = vadd.f32 %v1338, 3.0
        %v1566 = vadd.f32 %v1451, 3.0
        %v1567 = vadd.f32 %v1115, 3.0
        %v1568 = vadd.f32 %v1228, 3.0
        %v1569 = vadd.f32 %v1341, 3.0
        %v1570 = vadd.f32 %v1454, 3.0
        %v1571 = vadd.f32 %v1118, 3.0
        %v1572 = vadd.f32 %v1231, 3.0
        %v1573 = vadd.f32 %v1344, 3.0
        %v1574 = vadd.f32 %v1457, 3.0
        %v1575 = vadd.f32 %v1121, 3.0
        %v1576 = vadd.f32 %v1234, 3.0
        %v1577 = vadd.f32 %v1347, 3.0
        %v1578 = vadd.f32 %v1460, 3.0
        %v1579 = vadd.f32 %v1124, 3.0
        %v1580 = vadd.f32 %v1237, 3.0
        %v1581 = vadd.f32 %v1350, 3.0
        %v1582 = vadd.f32 %v1463, 3.0
        %v1583 = vadd.f32 %v1127, 3.0
        %v1584 = vadd.f32 %v1240, 3.0
        %v1585 = vadd.f32 %v1353, 3.0
        %v1586 = vadd.f32 %v1466, 3.0
        %v1587 = vadd.f32 %v1130, 3.0
        %v1588 = vadd.f32 %v1243, 3.0
        %v1589 = vadd.f32 %v1356, 3.0
        %v1590 = vadd.f32 %v1469, 3.0
        %v1591 = vadd.f32 %v1133, 3.0
        %v1592 = vadd.f32 %v1246, 3.0
        %v1593 = vadd.f32 %v1359, 3.0
        %v1594 = vadd.f32 %v1472, 3.0
        %v1595 = vadd.f32 %v1136, 3.0
        %v1596 = vadd.f32 %v1249, 3.0
        %v1597 = vadd.f32 %v1362, 3.0
        %v1598 = vadd.f32 %v1475, 3.0
        %v1599 = vadd.f32 %v1139, 3.0
        %v1600 = vadd.f32 %v1252, 3.0
        %v1601 = vadd.f32 %v1365, 3.0
        %v1602 = vadd.f32 %v1478, 3.0
        %v1603 = vadd.f32 %v1142, 3.0
        %v1604 = vadd.f32 %v1255, 3.0
        %v1605 = vadd.f32 %v1368, 3.0
        %v1606 = vadd.f32 %v1481, 3.0
        %v1607 = vadd.f32 %v1145, 3.0
        %v1608 = vadd.f32 %v1258, 3.0
        %v1609 = vadd.f32 %v1371, 3.0
        %v1610 = vadd.f32 %v1484, 3.0
        %v1611 = vadd.f32 %v1148, 3.0
        %v1612 = vadd.f32 %v1261, 3.0
        %v1613 = vadd.f32 %v1374, 3.0
        %v1614 = vadd.f32 %v1487, 3.0
        %v1615 = vadd.f32 %v1151, 3.0
        %v1616 = vadd.f32 %v1264, 3.0
        %v1617 = vadd.f32 %v1377, 3.0
        %v1618 = vadd.f32 %v1490, 3.0
        %v1619 = vadd.f32 %v1154, 3.0
        %v1620 = vadd.f32 %v1267, 3.0
        %v1621 = vadd.f32 %v1380, 3.0
        %v1622 = vadd.f32 %v1493, 3.0
        %v1623 = vmax.f32 %v1495, 0.0
        %v1624 = vmax.f32 %v1496, 0.0
        %v1625 = vmax.f32 %v1497, 0.0
        %v1626 = vmax.f32 %v1498, 0.0
        %v1627 = vmax.f32 %v1499, 0.0
        %v1628 = vmax.f32 %v1500, 0.0
        %v1629 = vmax.f32 %v1501, 0.0
        %v1630 = vmax.f32 %v1502, 0.0
        %v1631 = vmax.f32 %v1503, 0.0
        %v1632 = vmax.f32 %v1504, 0.0
        %v1633 = vmax.f32 %v1505, 0.0
        %v1634 = vmax.f32 %v1506, 0.0
        %v1635 = vmax.f32 %v1507, 0.0
        %v1636 = vmax.f32 %v1508, 0.0
        %v1637 = vmax.f32 %v1509, 0.0
        %v1638 = vmax.f32 %v1510, 0.0
        %v1639 = vmax.f32 %v1511, 0.0
        %v1640 = vmax.f32 %v1512, 0.0
        %v1641 = vmax.f32 %v1513, 0.0
        %v1642 = vmax.f32 %v1514, 0.0
        %v1643 = vmax.f32 %v1515, 0.0
        %v1644 = vmax.f32 %v1516, 0.0
        %v1645 = vmax.f32 %v1517, 0.0
        %v1646 = vmax.f32 %v1518, 0.0
        %v1647 = vmax.f32 %v1519, 0.0
        %v1648 = vmax.f32 %v1520, 0.0
        %v1649 = vmax.f32 %v1521, 0.0
        %v1650 = vmax.f32 %v1522, 0.0
        %v1651 = vmax.f32 %v1523, 0.0
        %v1652 = vmax.f32 %v1524, 0.0
        %v1653 = vmax.f32 %v1525, 0.0
        %v1654 = vmax.f32 %v1526, 0.0
        %v1655 = vmax.f32 %v1527, 0.0
        %v1656 = vmax.f32 %v1528, 0.0
        %v1657 = vmax.f32 %v1529, 0.0
        %v1658 = vmax.f32 %v1530, 0.0
        %v1659 = vmax.f32 %v1531, 0.0
        %v1660 = vmax.f32 %v1532, 0.0
        %v1661 = vmax.f32 %v1533, 0.0
        %v1662 = vmax.f32 %v1534, 0.0
        %v1663 = vmax.f32 %v1535, 0.0
        %v1664 = vmax.f32 %v1536, 0.0
        %v1665 = vmax.f32 %v1537, 0.0
        %v1666 = vmax.f32 %v1538, 0.0
        %v1667 = vmax.f32 %v1539, 0.0
        %v1668 = vmax.f32 %v1540, 0.0
        %v1669 = vmax.f32 %v1541, 0.0
        %v1670 = vmax.f32 %v1542, 0.0
        %v1671 = vmax.f32 %v1543, 0.0
        %v1672 = vmax.f32 %v1544, 0.0
        %v1673 = vmax.f32 %v1545, 0.0
        %v1674 = vmax.f32 %v1546, 0.0
        %v1675 = vmax.f32 %v1547, 0.0
        %v1676 = vmax.f32 %v1548, 0.0
        %v1677 = vmax.f32 %v1549, 0.0
        %v1678 = vmax.f32 %v1550, 0.0
        %v1679 = vmax.f32 %v1551, 0.0
        %v1680 = vmax.f32 %v1552, 0.0
        %v1681 = vmax.f32 %v1553, 0.0
        %v1682 = vmax.f32 %v1554, 0.0
        %v1683 = vmax.f32 %v1555, 0.0
        %v1684 = vmax.f32 %v1556, 0.0
        %v1685 = vmax.f32 %v1557, 0.0
        %v1686 = vmax.f32 %v1558, 0.0
        %v1687 = vmax.f32 %v1559, 0.0
        %v1688 = vmax.f32 %v1560, 0.0
        %v1689 = vmax.f32 %v1561, 0.0
        %v1690 = vmax.f32 %v1562, 0.0
        %v1691 = vmax.f32 %v1563, 0.0
        %v1692 = vmax.f32 %v1564, 0.0
        %v1693 = vmax.f32 %v1565, 0.0
        %v1694 = vmax.f32 %v1566, 0.0
        %v1695 = vmax.f32 %v1567, 0.0
        %v1696 = vmax.f32 %v1568, 0.0
        %v1697 = vmax.f32 %v1569, 0.0
        %v1698 = vmax.f32 %v1570, 0.0
        %v1699 = vmax.f32 %v1571, 0.0
        %v1700 = vmax.f32 %v1572, 0.0
        %v1701 = vmax.f32 %v1573, 0.0
        %v1702 = vmax.f32 %v1574, 0.0
        %v1703 = vmax.f32 %v1575, 0.0
        %v1704 = vmax.f32 %v1576, 0.0
        %v1705 = vmax.f32 %v1577, 0.0
        %v1706 = vmax.f32 %v1578, 0.0
        %v1707 = vmax.f32 %v1579, 0.0
        %v1708 = vmax.f32 %v1580, 0.0
        %v1709 = vmax.f32 %v1581, 0.0
        %v1710 = vmax.f32 %v1582, 0.0
        %v1711 = vmax.f32 %v1583, 0.0
        %v1712 = vmax.f32 %v1584, 0.0
        %v1713 = vmax.f32 %v1585, 0.0
        %v1714 = vmax.f32 %v1586, 0.0
        %v1715 = vmax.f32 %v1587, 0.0
        %v1716 = vmax.f32 %v1588, 0.0
        %v1717 = vmax.f32 %v1589, 0.0
        %v1718 = vmax.f32 %v1590, 0.0
        %v1719 = vmax.f32 %v1591, 0.0
        %v1720 = vmax.f32 %v1592, 0.0
        %v1721 = vmax.f32 %v1593, 0.0
        %v1722 = vmax.f32 %v1594, 0.0
        %v1723 = vmax.f32 %v1595, 0.0
        %v1724 = vmax.f32 %v1596, 0.0
        %v1725 = vmax.f32 %v1597, 0.0
        %v1726 = vmax.f32 %v1598, 0.0
        %v1727 = vmax.f32 %v1599, 0.0
        %v1728 = vmax.f32 %v1600, 0.0
        %v1729 = vmax.f32 %v1601, 0.0
        %v1730 = vmax.f32 %v1602, 0.0
        %v1731 = vmax.f32 %v1603, 0.0
        %v1732 = vmax.f32 %v1604, 0.0
        %v1733 = vmax.f32 %v1605, 0.0
        %v1734 = vmax.f32 %v1606, 0.0
        %v1735 = vmax.f32 %v1607, 0.0
        %v1736 = vmax.f32 %v1608, 0.0
        %v1737 = vmax.f32 %v1609, 0.0
        %v1738 = vmax.f32 %v1610, 0.0
        %v1739 = vmax.f32 %v1611, 0.0
        %v1740 = vmax.f32 %v1612, 0.0
        %v1741 = vmax.f32 %v1613, 0.0
        %v1742 = vmax.f32 %v1614, 0.0
        %v1743 = vmax.f32 %v1615, 0.0
        %v1744 = vmax.f32 %v1616, 0.0
        %v1745 = vmax.f32 %v1617, 0.0
        %v1746 = vmax.f32 %v1618, 0.0
        %v1747 = vmax.f32 %v1619, 0.0
        %v1748 = vmax.f32 %v1620, 0.0
        %v1749 = vmax.f32 %v1621, 0.0
        %v1750 = vmax.f32 %v1622, 0.0
        %v1751 = vmin.f32 %v1623, 6.0
        %v1752 = vmin.f32 %v1624, 6.0
        %v1753 = vmin.f32 %v1625, 6.0
        %v1754 = vmin.f32 %v1626, 6.0
        %v1755 = vmin.f32 %v1627, 6.0
        %v1756 = vmin.f32 %v1628, 6.0
        %v1757 = vmin.f32 %v1629, 6.0
        %v1758 = vmin.f32 %v1630, 6.0
        %v1759 = vmin.f32 %v1631, 6.0
        %v1760 = vmin.f32 %v1632, 6.0
        %v1761 = vmin.f32 %v1633, 6.0
        %v1762 = vmin.f32 %v1634, 6.0
        %v1763 = vmin.f32 %v1635, 6.0
        %v1764 = vmin.f32 %v1636, 6.0
        %v1765 = vmin.f32 %v1637, 6.0
        %v1766 = vmin.f32 %v1638, 6.0
        %v1767 = vmin.f32 %v1639, 6.0
        %v1768 = vmin.f32 %v1640, 6.0
        %v1769 = vmin.f32 %v1641, 6.0
        %v1770 = vmin.f32 %v1642, 6.0
        %v1771 = vmin.f32 %v1643, 6.0
        %v1772 = vmin.f32 %v1644, 6.0
        %v1773 = vmin.f32 %v1645, 6.0
        %v1774 = vmin.f32 %v1646, 6.0
        %v1775 = vmin.f32 %v1647, 6.0
        %v1776 = vmin.f32 %v1648, 6.0
        %v1777 = vmin.f32 %v1649, 6.0
        %v1778 = vmin.f32 %v1650, 6.0
        %v1779 = vmin.f32 %v1651, 6.0
        %v1780 = vmin.f32 %v1652, 6.0
        %v1781 = vmin.f32 %v1653, 6.0
        %v1782 = vmin.f32 %v1654, 6.0
        %v1783 = vmin.f32 %v1655, 6.0
        %v1784 = vmin.f32 %v1656, 6.0
        %v1785 = vmin.f32 %v1657, 6.0
        %v1786 = vmin.f32 %v1658, 6.0
        %v1787 = vmin.f32 %v1659, 6.0
        %v1788 = vmin.f32 %v1660, 6.0
        %v1789 = vmin.f32 %v1661, 6.0
        %v1790 = vmin.f32 %v1662, 6.0
        %v1791 = vmin.f32 %v1663, 6.0
        %v1792 = vmin.f32 %v1664, 6.0
        %v1793 = vmin.f32 %v1665, 6.0
        %v1794 = vmin.f32 %v1666, 6.0
        %v1795 = vmin.f32 %v1667, 6.0
        %v1796 = vmin.f32 %v1668, 6.0
        %v1797 = vmin.f32 %v1669, 6.0
        %v1798 = vmin.f32 %v1670, 6.0
        %v1799 = vmin.f32 %v1671, 6.0
        %v1800 = vmin.f32 %v1672, 6.0
        %v1801 = vmin.f32 %v1673, 6.0
        %v1802 = vmin.f32 %v1674, 6.0
        %v1803 = vmin.f32 %v1675, 6.0
        %v1804 = vmin.f32 %v1676, 6.0
        %v1805 = vmin.f32 %v1677, 6.0
        %v1806 = vmin.f32 %v1678, 6.0
        %v1807 = vmin.f32 %v1679, 6.0
        %v1808 = vmin.f32 %v1680, 6.0
        %v1809 = vmin.f32 %v1681, 6.0
        %v1810 = vmin.f32 %v1682, 6.0
        %v1811 = vmin.f32 %v1683, 6.0
        %v1812 = vmin.f32 %v1684, 6.0
        %v1813 = vmin.f32 %v1685, 6.0
        %v1814 = vmin.f32 %v1686, 6.0
        %v1815 = vmin.f32 %v1687, 6.0
        %v1816 = vmin.f32 %v1688, 6.0
        %v1817 = vmin.f32 %v1689, 6.0
        %v1818 = vmin.f32 %v1690, 6.0
        %v1819 = vmin.f32 %v1691, 6.0
        %v1820 = vmin.f32 %v1692, 6.0
        %v1821 = vmin.f32 %v1693, 6.0
        %v1822 = vmin.f32 %v1694, 6.0
        %v1823 = vmin.f32 %v1695, 6.0
        %v1824 = vmin.f32 %v1696, 6.0
        %v1825 = vmin.f32 %v1697, 6.0
        %v1826 = vmin.f32 %v1698, 6.0
        %v1827 = vmin.f32 %v1699, 6.0
        %v1828 = vmin.f32 %v1700, 6.0
        %v1829 = vmin.f32 %v1701, 6.0
        %v1830 = vmin.f32 %v1702, 6.0
        %v1831 = vmin.f32 %v1703, 6.0
        %v1832 = vmin.f32 %v1704, 6.0
        %v1833 = vmin.f32 %v1705, 6.0
        %v1834 = vmin.f32 %v1706, 6.0
        %v1835 = vmin.f32 %v1707, 6.0
        %v1836 = vmin.f32 %v1708, 6.0
        %v1837 = vmin.f32 %v1709, 6.0
        %v1838 = vmin.f32 %v1710, 6.0
        %v1839 = vmin.f32 %v1711, 6.0
        %v1840 = vmin.f32 %v1712, 6.0
        %v1841 = vmin.f32 %v1713, 6.0
        %v1842 = vmin.f32 %v1714, 6.0
        %v1843 = vmin.f32 %v1715, 6.0
        %v1844 = vmin.f32 %v1716, 6.0
        %v1845 = vmin.f32 %v1717, 6.0
        %v1846 = vmin.f32 %v1718, 6.0
        %v1847 = vmin.f32 %v1719, 6.0
        %v1848 = vmin.f32 %v1720, 6.0
        %v1849 = vmin.f32 %v1721, 6.0
        %v1850 = vmin.f32 %v1722, 6.0
        %v1851 = vmin.f32 %v1723, 6.0
        %v1852 = vmin.f32 %v1724, 6.0
        %v1853 = vmin.f32 %v1725, 6.0
        %v1854 = vmin.f32 %v1726, 6.0
        %v1855 = vmin.f32 %v1727, 6.0
        %v1856 = vmin.f32 %v1728, 6.0
        %v1857 = vmin.f32 %v1729, 6.0
        %v1858 = vmin.f32 %v1730, 6.0
        %v1859 = vmin.f32 %v1731, 6.0
        %v1860 = vmin.f32 %v1732, 6.0
        %v1861 = vmin.f32 %v1733, 6.0
        %v1862 = vmin.f32 %v1734, 6.0
        %v1863 = vmin.f32 %v1735, 6.0
        %v1864 = vmin.f32 %v1736, 6.0
        %v1865 = vmin.f32 %v1737, 6.0
        %v1866 = vmin.f32 %v1738, 6.0
        %v1867 = vmin.f32 %v1739, 6.0
        %v1868 = vmin.f32 %v1740, 6.0
        %v1869 = vmin.f32 %v1741, 6.0
        %v1870 = vmin.f32 %v1742, 6.0
        %v1871 = vmin.f32 %v1743, 6.0
        %v1872 = vmin.f32 %v1744, 6.0
        %v1873 = vmin.f32 %v1745, 6.0
        %v1874 = vmin.f32 %v1746, 6.0
        %v1875 = vmin.f32 %v1747, 6.0
        %v1876 = vmin.f32 %v1748, 6.0
        %v1877 = vmin.f32 %v1749, 6.0
        %v1878 = vmin.f32 %v1750, 6.0
        %v1879 = vmul.f32 %v1061, %v1751
        %v1880 = vmul.f32 %v1174, %v1752
        %v1881 = vmul.f32 %v1287, %v1753
        %v1882 = vmul.f32 %v1400, %v1754
        %v1883 = vmul.f32 %v1064, %v1755
        %v1884 = vmul.f32 %v1177, %v1756
        %v1885 = vmul.f32 %v1290, %v1757
        %v1886 = vmul.f32 %v1403, %v1758
        %v1887 = vmul.f32 %v1067, %v1759
        %v1888 = vmul.f32 %v1180, %v1760
        %v1889 = vmul.f32 %v1293, %v1761
        %v1890 = vmul.f32 %v1406, %v1762
        %v1891 = vmul.f32 %v1070, %v1763
        %v1892 = vmul.f32 %v1183, %v1764
        %v1893 = vmul.f32 %v1296, %v1765
        %v1894 = vmul.f32 %v1409, %v1766
        %v1895 = vmul.f32 %v1073, %v1767
        %v1896 = vmul.f32 %v1186, %v1768
        %v1897 = vmul.f32 %v1299, %v1769
        %v1898 = vmul.f32 %v1412, %v1770
        %v1899 = vmul.f32 %v1076, %v1771
        %v1900 = vmul.f32 %v1189, %v1772
        %v1901 = vmul.f32 %v1302, %v1773
        %v1902 = vmul.f32 %v1415, %v1774
        %v1903 = vmul.f32 %v1079, %v1775
        %v1904 = vmul.f32 %v1192, %v1776
        %v1905 = vmul.f32 %v1305, %v1777
        %v1906 = vmul.f32 %v1418, %v1778
        %v1907 = vmul.f32 %v1082, %v1779
        %v1908 = vmul.f32 %v1195, %v1780
        %v1909 = vmul.f32 %v1308, %v1781
        %v1910 = vmul.f32 %v1421, %v1782
        %v1911 = vmul.f32 %v1085, %v1783
        %v1912 = vmul.f32 %v1198, %v1784
        %v1913 = vmul.f32 %v1311, %v1785
        %v1914 = vmul.f32 %v1424, %v1786
        %v1915 = vmul.f32 %v1088, %v1787
        %v1916 = vmul.f32 %v1201, %v1788
        %v1917 = vmul.f32 %v1314, %v1789
        %v1918 = vmul.f32 %v1427, %v1790
        %v1919 = vmul.f32 %v1091, %v1791
        %v1920 = vmul.f32 %v1204, %v1792
        %v1921 = vmul.f32 %v1317, %v1793
        %v1922 = vmul.f32 %v1430, %v1794
        %v1923 = vmul.f32 %v1094, %v1795
        %v1924 = vmul.f32 %v1207, %v1796
        %v1925 = vmul.f32 %v1320, %v1797
        %v1926 = vmul.f32 %v1433, %v1798
        %v1927 = vmul.f32 %v1097, %v1799
        %v1928 = vmul.f32 %v1210, %v1800
        %v1929 = vmul.f32 %v1323, %v1801
        %v1930 = vmul.f32 %v1436, %v1802
        %v1931 = vmul.f32 %v1100, %v1803
        %v1932 = vmul.f32 %v1213, %v1804
        %v1933 = vmul.f32 %v1326, %v1805
        %v1934 = vmul.f32 %v1439, %v1806
        %v1935 = vmul.f32 %v1103, %v1807
        %v1936 = vmul.f32 %v1216, %v1808
        %v1937 = vmul.f32 %v1329, %v1809
        %v1938 = vmul.f32 %v1442, %v1810
        %v1939 = vmul.f32 %v1106, %v1811
        %v1940 = vmul.f32 %v1219, %v1812
        %v1941 = vmul.f32 %v1332, %v1813
        %v1942 = vmul.f32 %v1445, %v1814
        %v1943 = vmul.f32 %v1109, %v1815
        %v1944 = vmul.f32 %v1222, %v1816
        %v1945 = vmul.f32 %v1335, %v1817
        %v1946 = vmul.f32 %v1448, %v1818
        %v1947 = vmul.f32 %v1112, %v1819
        %v1948 = vmul.f32 %v1225, %v1820
        %v1949 = vmul.f32 %v1338, %v1821
        %v1950 = vmul.f32 %v1451, %v1822
        %v1951 = vmul.f32 %v1115, %v1823
        %v1952 = vmul.f32 %v1228, %v1824
        %v1953 = vmul.f32 %v1341, %v1825
        %v1954 = vmul.f32 %v1454, %v1826
        %v1955 = vmul.f32 %v1118, %v1827
        %v1956 = vmul.f32 %v1231, %v1828
        %v1957 = vmul.f32 %v1344, %v1829
        %v1958 = vmul.f32 %v1457, %v1830
        %v1959 = vmul.f32 %v1121, %v1831
        %v1960 = vmul.f32 %v1234, %v1832
        %v1961 = vmul.f32 %v1347, %v1833
        %v1962 = vmul.f32 %v1460, %v1834
        %v1963 = vmul.f32 %v1124, %v1835
        %v1964 = vmul.f32 %v1237, %v1836
        %v1965 = vmul.f32 %v1350, %v1837
        %v1966 = vmul.f32 %v1463, %v1838
        %v1967 = vmul.f32 %v1127, %v1839
        %v1968 = vmul.f32 %v1240, %v1840
        %v1969 = vmul.f32 %v1353, %v1841
        %v1970 = vmul.f32 %v1466, %v1842
        %v1971 = vmul.f32 %v1130, %v1843
        %v1972 = vmul.f32 %v1243, %v1844
        %v1973 = vmul.f32 %v1356, %v1845
        %v1974 = vmul.f32 %v1469, %v1846
        %v1975 = vmul.f32 %v1133, %v1847
        %v1976 = vmul.f32 %v1246, %v1848
        %v1977 = vmul.f32 %v1359, %v1849
        %v1978 = vmul.f32 %v1472, %v1850
        %v1979 = vmul.f32 %v1136, %v1851
        %v1980 = vmul.f32 %v1249, %v1852
        %v1981 = vmul.f32 %v1362, %v1853
        %v1982 = vmul.f32 %v1475, %v1854
        %v1983 = vmul.f32 %v1139, %v1855
        %v1984 = vmul.f32 %v1252, %v1856
        %v1985 = vmul.f32 %v1365, %v1857
        %v1986 = vmul.f32 %v1478, %v1858
        %v1987 = vmul.f32 %v1142, %v1859
        %v1988 = vmul.f32 %v1255, %v1860
        %v1989 = vmul.f32 %v1368, %v1861
        %v1990 = vmul.f32 %v1481, %v1862
        %v1991 = vmul.f32 %v1145, %v1863
        %v1992 = vmul.f32 %v1258, %v1864
        %v1993 = vmul.f32 %v1371, %v1865
        %v1994 = vmul.f32 %v1484, %v1866
        %v1995 = vmul.f32 %v1148, %v1867
        %v1996 = vmul.f32 %v1261, %v1868
        %v1997 = vmul.f32 %v1374, %v1869
        %v1998 = vmul.f32 %v1487, %v1870
        %v1999 = vmul.f32 %v1151, %v1871
        %v2000 = vmul.f32 %v1264, %v1872
        %v2001 = vmul.f32 %v1377, %v1873
        %v2002 = vmul.f32 %v1490, %v1874
        %v2003 = vmul.f32 %v1154, %v1875
        %v2004 = vmul.f32 %v1267, %v1876
        %v2005 = vmul.f32 %v1380, %v1877
        %v2006 = vmul.f32 %v1493, %v1878
        %v2007 = vmul.f32 %v1879, 0.16666667
        %v2008 = vmul.f32 %v1880, 0.16666667
        %v2009 = vmul.f32 %v1881, 0.16666667
        %v2010 = vmul.f32 %v1882, 0.16666667
        %v2011 = vmul.f32 %v1883, 0.16666667
        %v2012 = vmul.f32 %v1884, 0.16666667
        %v2013 = vmul.f32 %v1885, 0.16666667
        %v2014 = vmul.f32 %v1886, 0.16666667
        %v2015 = vmul.f32 %v1887, 0.16666667
        %v2016 = vmul.f32 %v1888, 0.16666667
        %v2017 = vmul.f32 %v1889, 0.16666667
        %v2018 = vmul.f32 %v1890, 0.16666667
        %v2019 = vmul.f32 %v1891, 0.16666667
        %v2020 = vmul.f32 %v1892, 0.16666667
        %v2021 = vmul.f32 %v1893, 0.16666667
        %v2022 = vmul.f32 %v1894, 0.16666667
        %v2023 = vmul.f32 %v1895, 0.16666667
        %v2024 = vmul.f32 %v1896, 0.16666667
        %v2025 = vmul.f32 %v1897, 0.16666667
        %v2026 = vmul.f32 %v1898, 0.16666667
        %v2027 = vmul.f32 %v1899, 0.16666667
        %v2028 = vmul.f32 %v1900, 0.16666667
        %v2029 = vmul.f32 %v1901, 0.16666667
        %v2030 = vmul.f32 %v1902, 0.16666667
        %v2031 = vmul.f32 %v1903, 0.16666667
        %v2032 = vmul.f32 %v1904, 0.16666667
        %v2033 = vmul.f32 %v1905, 0.16666667
        %v2034 = vmul.f32 %v1906, 0.16666667
        %v2035 = vmul.f32 %v1907, 0.16666667
        %v2036 = vmul.f32 %v1908, 0.16666667
        %v2037 = vmul.f32 %v1909, 0.16666667
        %v2038 = vmul.f32 %v1910, 0.16666667
        %v2039 = vmul.f32 %v1911, 0.16666667
        %v2040 = vmul.f32 %v1912, 0.16666667
        %v2041 = vmul.f32 %v1913, 0.16666667
        %v2042 = vmul.f32 %v1914, 0.16666667
        %v2043 = vmul.f32 %v1915, 0.16666667
        %v2044 = vmul.f32 %v1916, 0.16666667
        %v2045 = vmul.f32 %v1917, 0.16666667
        %v2046 = vmul.f32 %v1918, 0.16666667
        %v2047 = vmul.f32 %v1919, 0.16666667
        %v2048 = vmul.f32 %v1920, 0.16666667
        %v2049 = vmul.f32 %v1921, 0.16666667
        %v2050 = vmul.f32 %v1922, 0.16666667
        %v2051 = vmul.f32 %v1923, 0.16666667
        %v2052 = vmul.f32 %v1924, 0.16666667
        %v2053 = vmul.f32 %v1925, 0.16666667
        %v2054 = vmul.f32 %v1926, 0.16666667
        %v2055 = vmul.f32 %v1927, 0.16666667
        %v2056 = vmul.f32 %v1928, 0.16666667
        %v2057 = vmul.f32 %v1929, 0.16666667
        %v2058 = vmul.f32 %v1930, 0.16666667
        %v2059 = vmul.f32 %v1931, 0.16666667
        %v2060 = vmul.f32 %v1932, 0.16666667
        %v2061 = vmul.f32 %v1933, 0.16666667
        %v2062 = vmul.f32 %v1934, 0.16666667
        %v2063 = vmul.f32 %v1935, 0.16666667
        %v2064 = vmul.f32 %v1936, 0.16666667
        %v2065 = vmul.f32 %v1937, 0.16666667
        %v2066 = vmul.f32 %v1938, 0.16666667
        %v2067 = vmul.f32 %v1939, 0.16666667
        %v2068 = vmul.f32 %v1940, 0.16666667
        %v2069 = vmul.f32 %v1941, 0.16666667
        %v2070 = vmul.f32 %v1942, 0.16666667
        %v2071 = vmul.f32 %v1943, 0.16666667
        %v2072 = vmul.f32 %v1944, 0.16666667
        %v2073 = vmul.f32 %v1945, 0.16666667
        %v2074 = vmul.f32 %v1946, 0.16666667
        %v2075 = vmul.f32 %v1947, 0.16666667
        %v2076 = vmul.f32 %v1948, 0.16666667
        %v2077 = vmul.f32 %v1949, 0.16666667
        %v2078 = vmul.f32 %v1950, 0.16666667
        %v2079 = vmul.f32 %v1951, 0.16666667
        %v2080 = vmul.f32 %v1952, 0.16666667
        %v2081 = vmul.f32 %v1953, 0.16666667
        %v2082 = vmul.f32 %v1954, 0.16666667
        %v2083 = vmul.f32 %v1955, 0.16666667
        %v2084 = vmul.f32 %v1956, 0.16666667
        %v2085 = vmul.f32 %v1957, 0.16666667
        %v2086 = vmul.f32 %v1958, 0.16666667
        %v2087 = vmul.f32 %v1959, 0.16666667
        %v2088 = vmul.f32 %v1960, 0.16666667
        %v2089 = vmul.f32 %v1961, 0.16666667
        %v2090 = vmul.f32 %v1962, 0.16666667
        %v2091 = vmul.f32 %v1963, 0.16666667
        %v2092 = vmul.f32 %v1964, 0.16666667
        %v2093 = vmul.f32 %v1965, 0.16666667
        %v2094 = vmul.f32 %v1966, 0.16666667
        %v2095 = vmul.f32 %v1967, 0.16666667
        %v2096 = vmul.f32 %v1968, 0.16666667
        %v2097 = vmul.f32 %v1969, 0.16666667
        %v2098 = vmul.f32 %v1970, 0.16666667
        %v2099 = vmul.f32 %v1971, 0.16666667
        %v2100 = vmul.f32 %v1972, 0.16666667
        %v2101 = vmul.f32 %v1973, 0.16666667
        %v2102 = vmul.f32 %v1974, 0.16666667
        %v2103 = vmul.f32 %v1975, 0.16666667
        %v2104 = vmul.f32 %v1976, 0.16666667
        %v2105 = vmul.f32 %v1977, 0.16666667
        %v2106 = vmul.f32 %v1978, 0.16666667
        %v2107 = vmul.f32 %v1979, 0.16666667
        %v2108 = vmul.f32 %v1980, 0.16666667
        %v2109 = vmul.f32 %v1981, 0.16666667
        %v2110 = vmul.f32 %v1982, 0.16666667
        %v2111 = vmul.f32 %v1983, 0.16666667
        %v2112 = vmul.f32 %v1984, 0.16666667
        %v2113 = vmul.f32 %v1985, 0.16666667
        %v2114 = vmul.f32 %v1986, 0.16666667
        %v2115 = vmul.f32 %v1987, 0.16666667
        %v2116 = vmul.f32 %v1988, 0.16666667
        %v2117 = vmul.f32 %v1989, 0.16666667
        %v2118 = vmul.f32 %v1990, 0.16666667
        %v2119 = vmul.f32 %v1991, 0.16666667
        %v2120 = vmul.f32 %v1992, 0.16666667
        %v2121 = vmul.f32 %v1993, 0.16666667
        %v2122 = vmul.f32 %v1994, 0.16666667
        %v2123 = vmul.f32 %v1995, 0.16666667
        %v2124 = vmul.f32 %v1996, 0.16666667
        %v2125 = vmul.f32 %v1997, 0.16666667
        %v2126 = vmul.f32 %v1998, 0.16666667
        %v2127 = vmul.f32 %v1999, 0.16666667
        %v2128 = vmul.f32 %v2000, 0.16666667
        %v2129 = vmul.f32 %v2001, 0.16666667
        %v2130 = vmul.f32 %v2002, 0.16666667
        %v2131 = vmul.f32 %v2003, 0.16666667
        %v2132 = vmul.f32 %v2004, 0.16666667
        %v2133 = vmul.f32 %v2005, 0.16666667
        %v2134 = vmul.f32 %v2006, 0.16666667
        %2135 = vst [vmem:[%s190] sm:$0xff] %v2007
        %2136 = vst [vmem:[%s190 + $0x8] sm:$0xff] %v2008
        %2137 = vst [vmem:[%s190 + $0x10] sm:$0xff] %v2009
        %2138 = vst [vmem:[%s190 + $0x18] sm:$0xff] %v2010
        %2139 = vst [vmem:[%s190 + $0x20] sm:$0xff] %v2011
        %2140 = vst [vmem:[%s190 + $0x28] sm:$0xff] %v2012
        %2141 = vst [vmem:[%s190 + $0x30] sm:$0xff] %v2013
        %2142 = vst [vmem:[%s190 + $0x38] sm:$0xff] %v2014
        %2143 = vst [vmem:[%s190 + $0x40] sm:$0xff] %v2015
        %2144 = vst [vmem:[%s190 + $0x48] sm:$0xff] %v2016
        %2145 = vst [vmem:[%s190 + $0x50] sm:$0xff] %v2017
        %2146 = vst [vmem:[%s190 + $0x58] sm:$0xff] %v2018
        %2147 = vst [vmem:[%s190 + $0x60] sm:$0xff] %v2019
        %2148 = vst [vmem:[%s190 + $0x68] sm:$0xff] %v2020
        %2149 = vst [vmem:[%s190 + $0x70] sm:$0xff] %v2021
        %2150 = vst [vmem:[%s190 + $0x78] sm:$0xff] %v2022
        %2151 = vst [vmem:[%s190 + $0x80] sm:$0xff] %v2023
        %2152 = vst [vmem:[%s190 + $0x88] sm:$0xff] %v2024
        %2153 = vst [vmem:[%s190 + $0x90] sm:$0xff] %v2025
        %2154 = vst [vmem:[%s190 + $0x98] sm:$0xff] %v2026
        %2155 = vst [vmem:[%s190 + $0xa0] sm:$0xff] %v2027
        %2156 = vst [vmem:[%s190 + $0xa8] sm:$0xff] %v2028
        %2157 = vst [vmem:[%s190 + $0xb0] sm:$0xff] %v2029
        %2158 = vst [vmem:[%s190 + $0xb8] sm:$0xff] %v2030
        %2159 = vst [vmem:[%s190 + $0xc0] sm:$0xff] %v2031
        %2160 = vst [vmem:[%s190 + $0xc8] sm:$0xff] %v2032
        %2161 = vst [vmem:[%s190 + $0xd0] sm:$0xff] %v2033
        %2162 = vst [vmem:[%s190 + $0xd8] sm:$0xff] %v2034
        %2163 = vst [vmem:[%s190 + $0xe0] sm:$0xff] %v2035
        %2164 = vst [vmem:[%s190 + $0xe8] sm:$0xff] %v2036
        %2165 = vst [vmem:[%s190 + $0xf0] sm:$0xff] %v2037
        %2166 = vst [vmem:[%s190 + $0xf8] sm:$0xff] %v2038
        %2167 = vst [vmem:[%s190 + $0x100] sm:$0xff] %v2039
        %2168 = vst [vmem:[%s190 + $0x108] sm:$0xff] %v2040
        %2169 = vst [vmem:[%s190 + $0x110] sm:$0xff] %v2041
        %2170 = vst [vmem:[%s190 + $0x118] sm:$0xff] %v2042
        %2171 = vst [vmem:[%s190 + $0x120] sm:$0xff] %v2043
        %2172 = vst [vmem:[%s190 + $0x128] sm:$0xff] %v2044
        %2173 = vst [vmem:[%s190 + $0x130] sm:$0xff] %v2045
        %2174 = vst [vmem:[%s190 + $0x138] sm:$0xff] %v2046
        %2175 = vst [vmem:[%s190 + $0x140] sm:$0xff] %v2047
        %2176 = vst [vmem:[%s190 + $0x148] sm:$0xff] %v2048
        %2177 = vst [vmem:[%s190 + $0x150] sm:$0xff] %v2049
        %2178 = vst [vmem:[%s190 + $0x158] sm:$0xff] %v2050
        %2179 = vst [vmem:[%s190 + $0x160] sm:$0xff] %v2051
        %2180 = vst [vmem:[%s190 + $0x168] sm:$0xff] %v2052
        %2181 = vst [vmem:[%s190 + $0x170] sm:$0xff] %v2053
        %2182 = vst [vmem:[%s190 + $0x178] sm:$0xff] %v2054
        %2183 = vst [vmem:[%s190 + $0x180] sm:$0xff] %v2055
        %2184 = vst [vmem:[%s190 + $0x188] sm:$0xff] %v2056
        %2185 = vst [vmem:[%s190 + $0x190] sm:$0xff] %v2057
        %2186 = vst [vmem:[%s190 + $0x198] sm:$0xff] %v2058
        %2187 = vst [vmem:[%s190 + $0x1a0] sm:$0xff] %v2059
        %2188 = vst [vmem:[%s190 + $0x1a8] sm:$0xff] %v2060
        %2189 = vst [vmem:[%s190 + $0x1b0] sm:$0xff] %v2061
        %2190 = vst [vmem:[%s190 + $0x1b8] sm:$0xff] %v2062
        %2191 = vst [vmem:[%s190 + $0x1c0] sm:$0xff] %v2063
        %2192 = vst [vmem:[%s190 + $0x1c8] sm:$0xff] %v2064
        %2193 = vst [vmem:[%s190 + $0x1d0] sm:$0xff] %v2065
        %2194 = vst [vmem:[%s190 + $0x1d8] sm:$0xff] %v2066
        %2195 = vst [vmem:[%s190 + $0x1e0] sm:$0xff] %v2067
        %2196 = vst [vmem:[%s190 + $0x1e8] sm:$0xff] %v2068
        %2197 = vst [vmem:[%s190 + $0x1f0] sm:$0xff] %v2069
        %2198 = vst [vmem:[%s190 + $0x1f8] sm:$0xff] %v2070
        %2199 = vst [vmem:[%s190 + $0x200] sm:$0xff] %v2071
        %2200 = vst [vmem:[%s190 + $0x208] sm:$0xff] %v2072
        %2201 = vst [vmem:[%s190 + $0x210] sm:$0xff] %v2073
        %2202 = vst [vmem:[%s190 + $0x218] sm:$0xff] %v2074
        %2203 = vst [vmem:[%s190 + $0x220] sm:$0xff] %v2075
        %2204 = vst [vmem:[%s190 + $0x228] sm:$0xff] %v2076
        %2205 = vst [vmem:[%s190 + $0x230] sm:$0xff] %v2077
        %2206 = vst [vmem:[%s190 + $0x238] sm:$0xff] %v2078
        %2207 = vst [vmem:[%s190 + $0x240] sm:$0xff] %v2079
        %2208 = vst [vmem:[%s190 + $0x248] sm:$0xff] %v2080
        %2209 = vst [vmem:[%s190 + $0x250] sm:$0xff] %v2081
        %2210 = vst [vmem:[%s190 + $0x258] sm:$0xff] %v2082
        %2211 = vst [vmem:[%s190 + $0x260] sm:$0xff] %v2083
        %2212 = vst [vmem:[%s190 + $0x268] sm:$0xff] %v2084
        %2213 = vst [vmem:[%s190 + $0x270] sm:$0xff] %v2085
        %2214 = vst [vmem:[%s190 + $0x278] sm:$0xff] %v2086
        %2215 = vst [vmem:[%s190 + $0x280] sm:$0xff] %v2087
        %2216 = vst [vmem:[%s190 + $0x288] sm:$0xff] %v2088
        %2217 = vst [vmem:[%s190 + $0x290] sm:$0xff] %v2089
        %2218 = vst [vmem:[%s190 + $0x298] sm:$0xff] %v2090
        %2219 = vst [vmem:[%s190 + $0x2a0] sm:$0xff] %v2091
        %2220 = vst [vmem:[%s190 + $0x2a8] sm:$0xff] %v2092
        %2221 = vst [vmem:[%s190 + $0x2b0] sm:$0xff] %v2093
        %2222 = vst [vmem:[%s190 + $0x2b8] sm:$0xff] %v2094
        %2223 = vst [vmem:[%s190 + $0x2c0] sm:$0xff] %v2095
        %2224 = vst [vmem:[%s190 + $0x2c8] sm:$0xff] %v2096
        %2225 = vst [vmem:[%s190 + $0x2d0] sm:$0xff] %v2097
        %2226 = vst [vmem:[%s190 + $0x2d8] sm:$0xff] %v2098
        %2227 = vst [vmem:[%s190 + $0x2e0] sm:$0xff] %v2099
        %2228 = vst [vmem:[%s190 + $0x2e8] sm:$0xff] %v2100
        %2229 = vst [vmem:[%s190 + $0x2f0] sm:$0xff] %v2101
        %2230 = vst [vmem:[%s190 + $0x2f8] sm:$0xff] %v2102
        %2231 = vst [vmem:[%s190 + $0x300] sm:$0xff] %v2103
        %2232 = vst [vmem:[%s190 + $0x308] sm:$0xff] %v2104
        %2233 = vst [vmem:[%s190 + $0x310] sm:$0xff] %v2105
        %2234 = vst [vmem:[%s190 + $0x318] sm:$0xff] %v2106
        %2235 = vst [vmem:[%s190 + $0x320] sm:$0xff] %v2107
        %2236 = vst [vmem:[%s190 + $0x328] sm:$0xff] %v2108
        %2237 = vst [vmem:[%s190 + $0x330] sm:$0xff] %v2109
        %2238 = vst [vmem:[%s190 + $0x338] sm:$0xff] %v2110
        %2239 = vst [vmem:[%s190 + $0x340] sm:$0xff] %v2111
        %2240 = vst [vmem:[%s190 + $0x348] sm:$0xff] %v2112
        %2241 = vst [vmem:[%s190 + $0x350] sm:$0xff] %v2113
        %2242 = vst [vmem:[%s190 + $0x358] sm:$0xff] %v2114
        %2243 = vst [vmem:[%s190 + $0x360] sm:$0xff] %v2115
        %2244 = vst [vmem:[%s190 + $0x368] sm:$0xff] %v2116
        %2245 = vst [vmem:[%s190 + $0x370] sm:$0xff] %v2117
        %2246 = vst [vmem:[%s190 + $0x378] sm:$0xff] %v2118
        %2247 = vst [vmem:[%s190 + $0x380] sm:$0xff] %v2119
        %2248 = vst [vmem:[%s190 + $0x388] sm:$0xff] %v2120
        %2249 = vst [vmem:[%s190 + $0x390] sm:$0xff] %v2121
        %2250 = vst [vmem:[%s190 + $0x398] sm:$0xff] %v2122
        %2251 = vst [vmem:[%s190 + $0x3a0] sm:$0xff] %v2123
        %2252 = vst [vmem:[%s190 + $0x3a8] sm:$0xff] %v2124
        %2253 = vst [vmem:[%s190 + $0x3b0] sm:$0xff] %v2125
        %2254 = vst [vmem:[%s190 + $0x3b8] sm:$0xff] %v2126
        %2255 = vst [vmem:[%s190 + $0x3c0] sm:$0xff] %v2127
        %2256 = vst [vmem:[%s190 + $0x3c8] sm:$0xff] %v2128
        %2257 = vst [vmem:[%s190 + $0x3d0] sm:$0xff] %v2129
        %2258 = vst [vmem:[%s190 + $0x3d8] sm:$0xff] %v2130
        %2259 = vst [vmem:[%s190 + $0x3e0] sm:$0xff] %v2131
        %2260 = vst [vmem:[%s190 + $0x3e8] sm:$0xff] %v2132
        %2261 = vst [vmem:[%s190 + $0x3f0] sm:$0xff] %v2133
        %2262 = vst [vmem:[%s190 + $0x3f8] sm:$0xff] %v2134
        %s2263 = sand.u32 %s115, 1
        %s2264 = scalar_lea.sflag [#allocation3], %s2263
        %s2265 = sand.u32 %s115, 1
        %s2266 = smul.addr %s2265, 1024
        %s2267 = scalar_lea.vmem [#allocation2], %s2266
        // Predicated region
        $region37: #{model_forward.1} parent=35 // pred_check
          %p2268 = pneg %p125
        $region38: #{model_forward.1} parent=35 // pred_check_branch
          %2270 = sbr.rel (%p2268) target = $region40
        $region39: #{model_forward.1} parent=35 // pred_region
          %2272 = vsyncadd %s2264, 0
          %s2273 = smul.addr %s18, 128
          %s2274 = smul.addr %s2273, 8
          %s2275 = scalar_lea.hbm %s4, %s2274
          %s2276 = sshll.u32 %s2267, 4
          %s2277 = int_to_ptr.vmem [resolvable:$true] %s2276
          %s2278 = sshll.u32 %s2275, 4
          %s2279 = int_to_ptr.hbm [resolvable:$true] %s2278
          %2284 = dma.vmem_to_hbm [thread:$0]  %s2277, 16384, %s2279, %s2264, 512, 512, 32
        $region40: #{model_forward.1} parent=35 // pred_fallthru
          _
      $region36: #{model_forward.1} parent=5 // pred_fallthru
        _
      %p2285 = scmp.le.s32.totalorder 2, %s13
      // Predicated region
      $region41: #{model_forward.1} parent=5 // pred_check
        %p2286 = pneg %p2285
      $region42: #{model_forward.1} parent=5 // pred_check_branch
        %2288 = sbr.rel (%p2286) target = $region44
      $region43: #{model_forward.1} parent=5 // pred_region
        %s2289 = ssub.s32 %s13, 2
        // Predicated region
        $region45: #{model_forward.1} parent=43 // pred_check
          %p2290 = pneg %p131
        $region46: #{model_forward.1} parent=43 // pred_check_branch
          %2292 = sbr.rel (%p2290) target = $region48
        $region47: #{model_forward.1} parent=43 // pred_region
          %s2293 = sand.u32 %s116, 1
          %s2294 = scalar_lea.sflag [#allocation3], %s2293
          %s2295 = sand.u32 %s116, 1
          %s2296 = smul.addr %s2295, 1024
          %s2297 = scalar_lea.vmem [#allocation2], %s2296
          %2299 = dma.done %s2294, 16384
        $region48: #{model_forward.1} parent=43 // pred_fallthru
          _
      $region44: #{model_forward.1} parent=5 // pred_fallthru
        _
    $region6: #{model_forward.1} parent=1 // loop_footer
      %s17 = sadd.s32 1, %s13
    $region7: #{model_forward.1} parent=1 // loop_footer_branch
      %12 = sbr.rel target = $region3
    $region8: #{model_forward.1} parent=1 // loop_exit
      _
    %2300 = vsyncpa [#allocation3], 1
    %s2301 = scalar_lea.sflag [#allocation3], 1
    %2302 = vsyncpa %s2301, 1

</llo_original>
